<compile_context>
chip_gen: v6e
topology: v6e:2x2x1
jax: 0.10.0
libtpu: 0.0.40
codegen_flags: <defaults>
</compile_context>

<pallas_src>
import functools

import numpy as np
import jax
import jax.numpy as jnp
from jax.experimental import pallas as pl
from jax.experimental.pallas import tpu as pltpu

K = 3          # kernel_size
EPS = 1e-5     # InstanceNorm2d default eps
NEG_SLOPE = 0.2


def _make_kernel(offsets, inv_count):
    """offsets: python ints (kh*Wp + kw) for the 9 shifted windows; inv_count = 1/(H_out*W_out)."""

    def kernel(xp_ref, w_ref, mask_ref, o_ref):
        # xp_ref:   (Cin, Lp)        flattened zero-padded input, one batch element
        # w_ref:    (K*K, Cout, Cin) conv-form weights (flipped / channel-transposed)
        # mask_ref: (1, M)           1.0 where a flat column is a real output pixel
        # o_ref:    (Cout, M)        M = H_out * Wp; gutter columns are garbage (sliced off outside)
        cout, m = o_ref.shape

        # ConvTranspose2d hot path: 9 shifted-window matmuls accumulated in f32.
        acc = jnp.zeros((cout, m), jnp.float32)
        for kidx, off in enumerate(offsets):
            w_k = w_ref[kidx]                     # (Cout, Cin)
            x_k = xp_ref[:, off:off + m]          # (Cin, M) lane-dense shifted window
            acc = acc + jnp.dot(w_k, x_k, preferred_element_type=jnp.float32)

        # InstanceNorm2d (no affine, biased variance) over the valid spatial positions.
        mask = mask_ref[...]                                           # (1, M) f32
        mean = jnp.sum(acc * mask, axis=1, keepdims=True) * inv_count  # (Cout, 1)
        cen = acc - mean
        var = jnp.sum(cen * cen * mask, axis=1, keepdims=True) * inv_count
        yn = cen * jax.lax.rsqrt(var + EPS)

        # LeakyReLU(0.2)
        o_ref[...] = jnp.where(yn > 0, yn, NEG_SLOPE * yn).astype(o_ref.dtype)

    return kernel


@functools.partial(jax.jit, static_argnames=("compute_dtype",))
def conv_transpose_block(x, weight_t, bias=None, *, compute_dtype=jnp.float32):
    """x: (N, Cin, H, W); weight_t: (Cin, Cout, K, K)  [PyTorch ConvTranspose2d layout];
    bias: (Cout,) (accepted for API parity but mathematically a no-op before InstanceNorm).
    Returns (N, Cout, H+K-1, W+K-1) float32.
    compute_dtype: dtype of the matmul inputs (jnp.bfloat16 recommended on v6e/v7x)."""
    N, Cin, H, W = x.shape
    Cout = weight_t.shape[1]
    H_out, W_out = H + K - 1, W + K - 1
    Hp, Wp = H + 2 * (K - 1), W + 2 * (K - 1)
    extra_rows = -(-(K - 1) // Wp)        # bottom padding rows so every shifted window fits
    Lp = (Hp + extra_rows) * Wp           # flattened padded row length per channel
    M = H_out * Wp                        # flat output length (keeps padded row stride Wp)

    # (K-1)-padded input, flattened row-major. (Free reshape: memory is contiguous.)
    xp = jnp.pad(x, ((0, 0), (0, 0), (K - 1, K - 1 + extra_rows), (K - 1, K - 1)))
    xp = xp.reshape(N, Cin, Lp).astype(compute_dtype)

    # Weight -> (K*K, Cout, Cin):  w_all[kh*K+kw, o, i] = weight_t[i, o, K-1-kh, K-1-kw]
    w_conv = jnp.flip(weight_t, axis=(2, 3)).transpose(1, 0, 2, 3)            # (Cout, Cin, K, K)
    w_all = w_conv.transpose(2, 3, 0, 1).reshape(K * K, Cout, Cin).astype(compute_dtype)

    # Bias intentionally unused: a per-channel constant before InstanceNorm cancels exactly.
    del bias

    # Valid-column mask in flat padded-stride coordinates (trace-time constant).
    col = np.arange(M)
    mask = jnp.asarray(((col % Wp) < W_out).astype(np.float32).reshape(1, M))

    offsets = [kh * Wp + kw for kh in range(K) for kw in range(K)]
    kernel = _make_kernel(offsets, 1.0 / float(H_out * W_out))

    out_flat = pl.pallas_call(
        kernel,
        out_shape=jax.ShapeDtypeStruct((N, Cout, M), jnp.float32),
        grid_spec=pltpu.PrefetchScalarGridSpec(
            num_scalar_prefetch=0,
            grid=(N,),
            in_specs=[
                pl.BlockSpec((None, Cin, Lp), lambda n: (n, 0, 0)),     # padded input (per batch)
                pl.BlockSpec((K * K, Cout, Cin), lambda n: (0, 0, 0)),  # weights (broadcast)
                pl.BlockSpec((1, M), lambda n: (0, 0)),                 # valid-column mask
            ],
            out_specs=pl.BlockSpec((None, Cout, M), lambda n: (n, 0, 0)),
        ),
        compiler_params=pltpu.CompilerParams(
            dimension_semantics=("parallel",)),   # batch axis -> both TCs on v7x
    )(xp, w_all, mask)

    # Back to NCHW: free reshape, then drop the (Wp - W_out) gutter columns.
    return out_flat.reshape(N, Cout, H_out, Wp)[:, :, :, :W_out]


def _reference(x, weight_t, bias):
    """Pure-JAX reference of the PyTorch forward pass (includes the bias add)."""
    Cout = weight_t.shape[1]
    w_conv = jnp.flip(weight_t, axis=(2, 3)).transpose(1, 0, 2, 3)   # (Cout, Cin, K, K)
    y = jax.lax.conv_general_dilated(
        x, w_conv, window_strides=(1, 1),
        padding=[(K - 1, K - 1), (K - 1, K - 1)],
        dimension_numbers=("NCHW", "OIHW", "NCHW"))
    y = y + bias.reshape(1, Cout, 1, 1)
    mean = jnp.mean(y, axis=(2, 3), keepdims=True)
    var = jnp.mean((y - mean) ** 2, axis=(2, 3), keepdims=True)
    yn = (y - mean) * jax.lax.rsqrt(var + EPS)
    return jnp.where(yn > 0, yn, NEG_SLOPE * yn)


if __name__ == "__main__":
    # Small shapes consistent with the module: batch=2, Cin=4, Cout=4, 16x16 spatial.
    N, Cin, Cout, H, W = 2, 4, 4, 16, 16

    key = jax.random.PRNGKey(0)
    kx, kw, kb = jax.random.split(key, 3)
    x = jax.random.normal(kx, (N, Cin, H, W), dtype=jnp.float32)

    # Deterministic parameter init (PyTorch-style uniform bound 1/sqrt(Cin*K*K)).
    bound = 1.0 / (Cin * K * K) ** 0.5
    weight_t = jax.random.uniform(kw, (Cin, Cout, K, K), jnp.float32, -bound, bound)
    bias = jax.random.uniform(kb, (Cout,), jnp.float32, -bound, bound)

    ref = _reference(x, weight_t, bias)

    # f32 path (v5e-safe / accuracy reference).
    out_f32 = jax.block_until_ready(conv_transpose_block(x, weight_t, bias))
    assert out_f32.shape == (N, Cout, H + K - 1, W + K - 1)
    assert jnp.allclose(out_f32, ref, atol=1e-4, rtol=1e-4), "f32 kernel mismatch vs reference"

    # bf16 matmul-input path (v6e/v7x MXU fast path); norm/activation remain f32.
    out_bf16 = jax.block_until_ready(
        conv_transpose_block(x, weight_t, bias, compute_dtype=jnp.bfloat16))
    assert jnp.allclose(out_bf16, ref, atol=3e-2, rtol=3e-2), "bf16 kernel mismatch vs reference"

    print("KERNEL_OK")
</pallas_src>

<mosaic_0001>
module attributes {stable_mosaic.version = 11 : i64} {
  func.func @kernel(%arg0: i32, %arg1: memref<1x4x420xf32, #tpu.memory_space<vmem>>, %arg2: memref<9x4x4xf32, #tpu.memory_space<vmem>>, %arg3: memref<1x360xf32, #tpu.memory_space<vmem>>, %arg4: memref<1x4x360xf32, #tpu.memory_space<vmem>>) attributes {dimension_semantics = [#tpu.dimension_semantics<parallel>], iteration_bounds = array<i64: 2>, scalar_prefetch = 0 : i64, scratch_operands = 0 : i64, tpu.core_type = #tpu.core_type<tc>, window_params = [{transform_indices = @transform_0, window_bounds = array<i64: 1, 4, 420>}, {pipeline_mode = #tpu.pipeline_mode<synchronous>, transform_indices = @transform_1, window_bounds = array<i64: 9, 4, 4>}, {pipeline_mode = #tpu.pipeline_mode<synchronous>, transform_indices = @transform_2, window_bounds = array<i64: 1, 360>}, {transform_indices = @transform_3, window_bounds = array<i64: 1, 4, 360>}]} {
    %cst = arith.constant 0.000000e+00 : f32
    %0 = vector.broadcast %cst : f32 to vector<4x360xf32>
    %c0 = arith.constant 0 : index
    %c0_0 = arith.constant 0 : index
    %c0_1 = arith.constant 0 : index
    %1 = vector.load %arg2[%c0, %c0_0, %c0_1] : memref<9x4x4xf32, #tpu.memory_space<vmem>>, vector<1x4x4xf32>
    %2 = vector.shape_cast %1 : vector<1x4x4xf32> to vector<4x4xf32>
    %c0_2 = arith.constant 0 : index
    %c0_3 = arith.constant 0 : index
    %c0_4 = arith.constant 0 : index
    %3 = vector.load %arg1[%c0_2, %c0_3, %c0_4] : memref<1x4x420xf32, #tpu.memory_space<vmem>>, vector<1x4x360xf32>
    %4 = vector.shape_cast %3 : vector<1x4x360xf32> to vector<4x360xf32>
    %cst_5 = arith.constant dense<0.000000e+00> : vector<4x360xf32>
    %5 = tpu.matmul %2, %4, %cst_5 {dimension_numbers = #tpu.dot_dimension_numbers<[1], [0], [0], [1], [0, 0, 1, 1], [], []>} : vector<4x4xf32>, vector<4x360xf32>, vector<4x360xf32> -> vector<4x360xf32>
    %6 = arith.addf %0, %5 : vector<4x360xf32>
    %c1 = arith.constant 1 : index
    %c0_6 = arith.constant 0 : index
    %c0_7 = arith.constant 0 : index
    %7 = vector.load %arg2[%c1, %c0_6, %c0_7] : memref<9x4x4xf32, #tpu.memory_space<vmem>>, vector<1x4x4xf32>
    %8 = vector.shape_cast %7 : vector<1x4x4xf32> to vector<4x4xf32>
    %c0_8 = arith.constant 0 : index
    %c0_9 = arith.constant 0 : index
    %c1_10 = arith.constant 1 : index
    %9 = vector.load %arg1[%c0_8, %c0_9, %c1_10] : memref<1x4x420xf32, #tpu.memory_space<vmem>>, vector<1x4x360xf32>
    %10 = vector.shape_cast %9 : vector<1x4x360xf32> to vector<4x360xf32>
    %cst_11 = arith.constant dense<0.000000e+00> : vector<4x360xf32>
    %11 = tpu.matmul %8, %10, %cst_11 {dimension_numbers = #tpu.dot_dimension_numbers<[1], [0], [0], [1], [0, 0, 1, 1], [], []>} : vector<4x4xf32>, vector<4x360xf32>, vector<4x360xf32> -> vector<4x360xf32>
    %12 = arith.addf %6, %11 : vector<4x360xf32>
    %c2 = arith.constant 2 : index
    %c0_12 = arith.constant 0 : index
    %c0_13 = arith.constant 0 : index
    %13 = vector.load %arg2[%c2, %c0_12, %c0_13] : memref<9x4x4xf32, #tpu.memory_space<vmem>>, vector<1x4x4xf32>
    %14 = vector.shape_cast %13 : vector<1x4x4xf32> to vector<4x4xf32>
    %c0_14 = arith.constant 0 : index
    %c0_15 = arith.constant 0 : index
    %c2_16 = arith.constant 2 : index
    %15 = vector.load %arg1[%c0_14, %c0_15, %c2_16] : memref<1x4x420xf32, #tpu.memory_space<vmem>>, vector<1x4x360xf32>
    %16 = vector.shape_cast %15 : vector<1x4x360xf32> to vector<4x360xf32>
    %cst_17 = arith.constant dense<0.000000e+00> : vector<4x360xf32>
    %17 = tpu.matmul %14, %16, %cst_17 {dimension_numbers = #tpu.dot_dimension_numbers<[1], [0], [0], [1], [0, 0, 1, 1], [], []>} : vector<4x4xf32>, vector<4x360xf32>, vector<4x360xf32> -> vector<4x360xf32>
    %18 = arith.addf %12, %17 : vector<4x360xf32>
    %c3 = arith.constant 3 : index
    %c0_18 = arith.constant 0 : index
    %c0_19 = arith.constant 0 : index
    %19 = vector.load %arg2[%c3, %c0_18, %c0_19] : memref<9x4x4xf32, #tpu.memory_space<vmem>>, vector<1x4x4xf32>
    %20 = vector.shape_cast %19 : vector<1x4x4xf32> to vector<4x4xf32>
    %c0_20 = arith.constant 0 : index
    %c0_21 = arith.constant 0 : index
    %c20 = arith.constant 20 : index
    %21 = vector.load %arg1[%c0_20, %c0_21, %c20] : memref<1x4x420xf32, #tpu.memory_space<vmem>>, vector<1x4x360xf32>
    %22 = vector.shape_cast %21 : vector<1x4x360xf32> to vector<4x360xf32>
    %cst_22 = arith.constant dense<0.000000e+00> : vector<4x360xf32>
    %23 = tpu.matmul %20, %22, %cst_22 {dimension_numbers = #tpu.dot_dimension_numbers<[1], [0], [0], [1], [0, 0, 1, 1], [], []>} : vector<4x4xf32>, vector<4x360xf32>, vector<4x360xf32> -> vector<4x360xf32>
    %24 = arith.addf %18, %23 : vector<4x360xf32>
    %c4 = arith.constant 4 : index
    %c0_23 = arith.constant 0 : index
    %c0_24 = arith.constant 0 : index
    %25 = vector.load %arg2[%c4, %c0_23, %c0_24] : memref<9x4x4xf32, #tpu.memory_space<vmem>>, vector<1x4x4xf32>
    %26 = vector.shape_cast %25 : vector<1x4x4xf32> to vector<4x4xf32>
    %c0_25 = arith.constant 0 : index
    %c0_26 = arith.constant 0 : index
    %c21 = arith.constant 21 : index
    %27 = vector.load %arg1[%c0_25, %c0_26, %c21] : memref<1x4x420xf32, #tpu.memory_space<vmem>>, vector<1x4x360xf32>
    %28 = vector.shape_cast %27 : vector<1x4x360xf32> to vector<4x360xf32>
    %cst_27 = arith.constant dense<0.000000e+00> : vector<4x360xf32>
    %29 = tpu.matmul %26, %28, %cst_27 {dimension_numbers = #tpu.dot_dimension_numbers<[1], [0], [0], [1], [0, 0, 1, 1], [], []>} : vector<4x4xf32>, vector<4x360xf32>, vector<4x360xf32> -> vector<4x360xf32>
    %30 = arith.addf %24, %29 : vector<4x360xf32>
    %c5 = arith.constant 5 : index
    %c0_28 = arith.constant 0 : index
    %c0_29 = arith.constant 0 : index
    %31 = vector.load %arg2[%c5, %c0_28, %c0_29] : memref<9x4x4xf32, #tpu.memory_space<vmem>>, vector<1x4x4xf32>
    %32 = vector.shape_cast %31 : vector<1x4x4xf32> to vector<4x4xf32>
    %c0_30 = arith.constant 0 : index
    %c0_31 = arith.constant 0 : index
    %c22 = arith.constant 22 : index
    %33 = vector.load %arg1[%c0_30, %c0_31, %c22] : memref<1x4x420xf32, #tpu.memory_space<vmem>>, vector<1x4x360xf32>
    %34 = vector.shape_cast %33 : vector<1x4x360xf32> to vector<4x360xf32>
    %cst_32 = arith.constant dense<0.000000e+00> : vector<4x360xf32>
    %35 = tpu.matmul %32, %34, %cst_32 {dimension_numbers = #tpu.dot_dimension_numbers<[1], [0], [0], [1], [0, 0, 1, 1], [], []>} : vector<4x4xf32>, vector<4x360xf32>, vector<4x360xf32> -> vector<4x360xf32>
    %36 = arith.addf %30, %35 : vector<4x360xf32>
    %c6 = arith.constant 6 : index
    %c0_33 = arith.constant 0 : index
    %c0_34 = arith.constant 0 : index
    %37 = vector.load %arg2[%c6, %c0_33, %c0_34] : memref<9x4x4xf32, #tpu.memory_space<vmem>>, vector<1x4x4xf32>
    %38 = vector.shape_cast %37 : vector<1x4x4xf32> to vector<4x4xf32>
    %c0_35 = arith.constant 0 : index
    %c0_36 = arith.constant 0 : index
    %c40 = arith.constant 40 : index
    %39 = vector.load %arg1[%c0_35, %c0_36, %c40] : memref<1x4x420xf32, #tpu.memory_space<vmem>>, vector<1x4x360xf32>
    %40 = vector.shape_cast %39 : vector<1x4x360xf32> to vector<4x360xf32>
    %cst_37 = arith.constant dense<0.000000e+00> : vector<4x360xf32>
    %41 = tpu.matmul %38, %40, %cst_37 {dimension_numbers = #tpu.dot_dimension_numbers<[1], [0], [0], [1], [0, 0, 1, 1], [], []>} : vector<4x4xf32>, vector<4x360xf32>, vector<4x360xf32> -> vector<4x360xf32>
    %42 = arith.addf %36, %41 : vector<4x360xf32>
    %c7 = arith.constant 7 : index
    %c0_38 = arith.constant 0 : index
    %c0_39 = arith.constant 0 : index
    %43 = vector.load %arg2[%c7, %c0_38, %c0_39] : memref<9x4x4xf32, #tpu.memory_space<vmem>>, vector<1x4x4xf32>
    %44 = vector.shape_cast %43 : vector<1x4x4xf32> to vector<4x4xf32>
    %c0_40 = arith.constant 0 : index
    %c0_41 = arith.constant 0 : index
    %c41 = arith.constant 41 : index
    %45 = vector.load %arg1[%c0_40, %c0_41, %c41] : memref<1x4x420xf32, #tpu.memory_space<vmem>>, vector<1x4x360xf32>
    %46 = vector.shape_cast %45 : vector<1x4x360xf32> to vector<4x360xf32>
    %cst_42 = arith.constant dense<0.000000e+00> : vector<4x360xf32>
    %47 = tpu.matmul %44, %46, %cst_42 {dimension_numbers = #tpu.dot_dimension_numbers<[1], [0], [0], [1], [0, 0, 1, 1], [], []>} : vector<4x4xf32>, vector<4x360xf32>, vector<4x360xf32> -> vector<4x360xf32>
    %48 = arith.addf %42, %47 : vector<4x360xf32>
    %c8 = arith.constant 8 : index
    %c0_43 = arith.constant 0 : index
    %c0_44 = arith.constant 0 : index
    %49 = vector.load %arg2[%c8, %c0_43, %c0_44] : memref<9x4x4xf32, #tpu.memory_space<vmem>>, vector<1x4x4xf32>
    %50 = vector.shape_cast %49 : vector<1x4x4xf32> to vector<4x4xf32>
    %c0_45 = arith.constant 0 : index
    %c0_46 = arith.constant 0 : index
    %c42 = arith.constant 42 : index
    %51 = vector.load %arg1[%c0_45, %c0_46, %c42] : memref<1x4x420xf32, #tpu.memory_space<vmem>>, vector<1x4x360xf32>
    %52 = vector.shape_cast %51 : vector<1x4x360xf32> to vector<4x360xf32>
    %cst_47 = arith.constant dense<0.000000e+00> : vector<4x360xf32>
    %53 = tpu.matmul %50, %52, %cst_47 {dimension_numbers = #tpu.dot_dimension_numbers<[1], [0], [0], [1], [0, 0, 1, 1], [], []>} : vector<4x4xf32>, vector<4x360xf32>, vector<4x360xf32> -> vector<4x360xf32>
    %54 = arith.addf %48, %53 : vector<4x360xf32>
    %c0_48 = arith.constant 0 : index
    %c0_49 = arith.constant 0 : index
    %55 = vector.load %arg3[%c0_48, %c0_49] : memref<1x360xf32, #tpu.memory_space<vmem>>, vector<1x360xf32>
    %56 = vector.broadcast %55 : vector<1x360xf32> to vector<4x360xf32>
    %57 = arith.mulf %54, %56 : vector<4x360xf32>
    %cst_50 = arith.constant dense<0.000000e+00> : vector<4xf32>
    %58 = vector.multi_reduction <add>, %57, %cst_50 [1] : vector<4x360xf32> to vector<4xf32>
    %59 = vector.shape_cast %58 : vector<4xf32> to vector<4x1xf32>
    %cst_51 = arith.constant 0.00308641978 : f32
    %60 = vector.broadcast %cst_51 : f32 to vector<4x1xf32>
    %61 = arith.mulf %59, %60 : vector<4x1xf32>
    %62 = vector.broadcast %61 : vector<4x1xf32> to vector<4x360xf32>
    %63 = arith.subf %54, %62 : vector<4x360xf32>
    %64 = arith.mulf %63, %63 : vector<4x360xf32>
    %65 = vector.broadcast %55 : vector<1x360xf32> to vector<4x360xf32>
    %66 = arith.mulf %64, %65 : vector<4x360xf32>
    %cst_52 = arith.constant dense<0.000000e+00> : vector<4xf32>
    %67 = vector.multi_reduction <add>, %66, %cst_52 [1] : vector<4x360xf32> to vector<4xf32>
    %68 = vector.shape_cast %67 : vector<4xf32> to vector<4x1xf32>
    %cst_53 = arith.constant 0.00308641978 : f32
    %69 = vector.broadcast %cst_53 : f32 to vector<4x1xf32>
    %70 = arith.mulf %68, %69 : vector<4x1xf32>
    %cst_54 = arith.constant 9.99999974E-6 : f32
    %71 = vector.broadcast %cst_54 : f32 to vector<4x1xf32>
    %72 = arith.addf %70, %71 : vector<4x1xf32>
    %73 = math.rsqrt %72 : vector<4x1xf32>
    %74 = vector.broadcast %73 : vector<4x1xf32> to vector<4x360xf32>
    %75 = arith.mulf %63, %74 : vector<4x360xf32>
    %cst_55 = arith.constant 0.000000e+00 : f32
    %76 = vector.broadcast %cst_55 : f32 to vector<4x360xf32>
    %77 = arith.cmpf ogt, %75, %76 : vector<4x360xf32>
    %cst_56 = arith.constant 2.000000e-01 : f32
    %78 = vector.broadcast %cst_56 : f32 to vector<4x360xf32>
    %79 = arith.mulf %78, %75 : vector<4x360xf32>
    %80 = arith.select %77, %75, %79 : vector<4x360xi1>, vector<4x360xf32>
    %c0_57 = arith.constant 0 : index
    %c0_58 = arith.constant 0 : index
    %c0_59 = arith.constant 0 : index
    %81 = vector.load %arg4[%c0_57, %c0_58, %c0_59] : memref<1x4x360xf32, #tpu.memory_space<vmem>>, vector<1x4x360xf32>
    %82 = vector.shape_cast %81 : vector<1x4x360xf32> to vector<4x360xf32>
    %83 = vector.shape_cast %80 : vector<4x360xf32> to vector<1x4x360xf32>
    tpu.vector_store %arg4[%c0_57, %c0_58, %c0_59], %83 {strides = array<i32>} : memref<1x4x360xf32, #tpu.memory_space<vmem>>, vector<1x4x360xf32>,
    return
  }
  func.func @transform_0(%arg0: i32) -> (i32, i32, i32) {
    %c0_i32 = arith.constant 0 : i32
    %c0_i32_0 = arith.constant 0 : i32
    %c0_i32_1 = arith.constant 0 : i32
    return %arg0, %c0_i32, %c0_i32_0 : i32, i32, i32
  }
  func.func @transform_1(%arg0: i32) -> (i32, i32, i32) {
    %c0_i32 = arith.constant 0 : i32
    %c0_i32_0 = arith.constant 0 : i32
    %c0_i32_1 = arith.constant 0 : i32
    %c0_i32_2 = arith.constant 0 : i32
    return %c0_i32, %c0_i32_0, %c0_i32_1 : i32, i32, i32
  }
  func.func @transform_2(%arg0: i32) -> (i32, i32) {
    %c0_i32 = arith.constant 0 : i32
    %c0_i32_0 = arith.constant 0 : i32
    %c0_i32_1 = arith.constant 0 : i32
    return %c0_i32, %c0_i32_0 : i32, i32
  }
  func.func @transform_3(%arg0: i32) -> (i32, i32, i32) {
    %c0_i32 = arith.constant 0 : i32
    %c0_i32_0 = arith.constant 0 : i32
    %c0_i32_1 = arith.constant 0 : i32
    return %arg0, %c0_i32, %c0_i32_0 : i32, i32, i32
  }
}

</mosaic_0001>

<llo_original>
// kernel: conv_transpose_block.1
$region0: #{conv_transpose_block.1}
  #allocation0 [shape = 'u32[]', space=smem, size = 0x4, offset = 0x4, fixed_abs, tag = 'smem constant byte address 0x4 - core index']
  #allocation1 [shape = 'u32[144,128]{1,0:T(1,128)}', space=vmem, size = 0x12000, scoped, tag = 'internal scratch']
  %s0 = inlined_call_operand.vmem [shape: f32[2,4,420], index: 0, kind: input, shape index: {}]
  %s1 = inlined_call_operand.vmem [shape: f32[9,4,4], index: 1, kind: input, shape index: {}]
  %s2 = inlined_call_operand.vmem [shape: f32[1,360], index: 2, kind: input, shape index: {}]
  %s3 = inlined_call_operand.vmem [shape: f32[2,4,360], index: 3, kind: output, shape index: {}]
  %s4 = sld [smem:[#allocation0]]
  $region45: #{conv_transpose_block.1} parent=0
    _
  %s6 = ssub.s32 1, %s4
  %s7 = scalar_select 0, %s6, %s4
  loop: start=0, step=1, limit=4
  $region2: #{conv_transpose_block.1} parent=0 // loop_pre_header
    _
  $region3: #{conv_transpose_block.1} parent=0 // loop_header
    %s9 = sphi 0, %s13
    %p10 = scmp.ge.s32.totalorder %s9, 4
    %s19 = sphi 0, %s21
    %s22 = sphi 0, %s19
    %s23 = sphi 0, %s22
    %s39 = sphi 0, %s23
    %s43 = sphi 0, %s43
    %s45 = sphi 0, %s43
    %s46 = sphi 0, %s45
    %s60 = sphi 0, %s46
    %s64 = sphi 0, %s64
    %s66 = sphi 0, %s64
    %s67 = sphi 0, %s66
    %s81 = sphi 0, %s67
    %s87 = sphi 0, %s89
    %s90 = sphi 0, %s87
    %s91 = sphi 0, %s90
    %s107 = sphi 0, %s91
  $region4: #{conv_transpose_block.1} parent=0 // loop_header_branch
    %12 = sbr.rel (%p10) target = $region8
  $region5: #{conv_transpose_block.1} parent=0 // loop_body
    %s14 = ssub.s32 %s9, 1
    %s15 = ssub.s32 %s9, 2
    %s16 = sadd.s32 %s9, 1
    %s17 = ssub.s32 %s9, %s16
    %p18 = scmp.eq.s32.totalorder %s17, 0
    %s20 = sadd.s32 %s19, 1
    %s21 = scalar_select %p18, %s19, %s20
    %p24 = pneg %p18
    %p25 = scmp.eq.s32.totalorder %s9, 1
    %p26 = por %p24, %p25
    %p27 = scmp.ne.s32.totalorder %s19, %s22
    %p28 = scmp.eq.s32.totalorder %s9, 0
    %p29 = por %p27, %p28
    %p30 = scmp.ne.s32.totalorder %s19, %s22
    %p31 = scmp.eq.s32.totalorder %s14, 1
    %p32 = por %p30, %p31
    %p33 = scmp.ne.s32.totalorder %s22, %s23
    %p34 = scmp.eq.s32.totalorder %s14, 0
    %p35 = por %p33, %p34
    %p36 = scmp.ne.s32.totalorder %s22, %s23
    %p37 = scmp.eq.s32.totalorder %s15, 1
    %p38 = por %p36, %p37
    %p40 = scmp.ne.s32.totalorder %s23, %s39
    %p41 = scmp.eq.s32.totalorder %s15, 0
    %p42 = por %p40, %p41
    %s44 = sadd.s32 %s43, 1
    %p47 = scmp.eq.s32.totalorder %s9, 1
    %p48 = scmp.ne.s32.totalorder %s43, %s45
    %p49 = scmp.eq.s32.totalorder %s9, 0
    %p50 = por %p48, %p49
    %p51 = scmp.ne.s32.totalorder %s43, %s45
    %p52 = scmp.eq.s32.totalorder %s14, 1
    %p53 = por %p51, %p52
    %p54 = scmp.ne.s32.totalorder %s45, %s46
    %p55 = scmp.eq.s32.totalorder %s14, 0
    %p56 = por %p54, %p55
    %p57 = scmp.ne.s32.totalorder %s45, %s46
    %p58 = scmp.eq.s32.totalorder %s15, 1
    %p59 = por %p57, %p58
    %p61 = scmp.ne.s32.totalorder %s46, %s60
    %p62 = scmp.eq.s32.totalorder %s15, 0
    %p63 = por %p61, %p62
    %s65 = sadd.s32 %s64, 1
    %p68 = scmp.eq.s32.totalorder %s9, 1
    %p69 = scmp.ne.s32.totalorder %s64, %s66
    %p70 = scmp.eq.s32.totalorder %s9, 0
    %p71 = por %p69, %p70
    %p72 = scmp.ne.s32.totalorder %s64, %s66
    %p73 = scmp.eq.s32.totalorder %s14, 1
    %p74 = por %p72, %p73
    %p75 = scmp.ne.s32.totalorder %s66, %s67
    %p76 = scmp.eq.s32.totalorder %s14, 0
    %p77 = por %p75, %p76
    %p78 = scmp.ne.s32.totalorder %s66, %s67
    %p79 = scmp.eq.s32.totalorder %s15, 1
    %p80 = por %p78, %p79
    %p82 = scmp.ne.s32.totalorder %s67, %s81
    %p83 = scmp.eq.s32.totalorder %s15, 0
    %p84 = por %p82, %p83
    %s85 = ssub.s32 %s9, %s16
    %p86 = scmp.eq.s32.totalorder %s85, 0
    %s88 = sadd.s32 %s87, 1
    %s89 = scalar_select %p86, %s87, %s88
    %p92 = pneg %p86
    %p93 = scmp.eq.s32.totalorder %s9, 1
    %p94 = por %p92, %p93
    %p95 = scmp.ne.s32.totalorder %s87, %s90
    %p96 = scmp.eq.s32.totalorder %s9, 0
    %p97 = por %p95, %p96
    %p98 = scmp.ne.s32.totalorder %s87, %s90
    %p99 = scmp.eq.s32.totalorder %s14, 1
    %p100 = por %p98, %p99
    %p101 = scmp.ne.s32.totalorder %s90, %s91
    %p102 = scmp.eq.s32.totalorder %s14, 0
    %p103 = por %p101, %p102
    %p104 = scmp.ne.s32.totalorder %s90, %s91
    %p105 = scmp.eq.s32.totalorder %s15, 1
    %p106 = por %p104, %p105
    %p108 = scmp.ne.s32.totalorder %s91, %s107
    %p109 = scmp.eq.s32.totalorder %s15, 0
    %p110 = por %p108, %p109
    %p111 = scmp.le.s32.totalorder 1, %s9
    %p112 = scmp.lt.s32.totalorder %s9, 3
    %p113 = pnand %p111, %p112
    %p114 = pneg %p113
    // Predicated region
    $region9: #{conv_transpose_block.1} parent=5 // pred_check
      _
    $region10: #{conv_transpose_block.1} parent=5 // pred_check_branch
      %116 = sbr.rel (%p113) target = $region12
    $region11: #{conv_transpose_block.1} parent=5 // pred_region
      %s117 = ssub.s32 %s9, 1
      // Predicated region
      $region13: #{conv_transpose_block.1} parent=11 // pred_check
        %p118 = pneg %p56
      $region14: #{conv_transpose_block.1} parent=11 // pred_check_branch
        %120 = sbr.rel (%p118) target = $region16
      $region15: #{conv_transpose_block.1} parent=11 // pred_region
        _
      $region16: #{conv_transpose_block.1} parent=11 // pred_fallthru
        _
      // Predicated region
      $region17: #{conv_transpose_block.1} parent=11 // pred_check
        %p121 = pneg %p77
      $region18: #{conv_transpose_block.1} parent=11 // pred_check_branch
        %123 = sbr.rel (%p121) target = $region20
      $region19: #{conv_transpose_block.1} parent=11 // pred_region
        _
      $region20: #{conv_transpose_block.1} parent=11 // pred_fallthru
        _
    $region12: #{conv_transpose_block.1} parent=5 // pred_fallthru
      _
    %p124 = scmp.lt.s32.totalorder %s9, 2
    // Predicated region
    $region21: #{conv_transpose_block.1} parent=5 // pred_check
      %p125 = pneg %p124
    $region22: #{conv_transpose_block.1} parent=5 // pred_check_branch
      %127 = sbr.rel (%p125) target = $region24
    $region23: #{conv_transpose_block.1} parent=5 // pred_region
      // Predicated region
      $region25: #{conv_transpose_block.1} parent=23 // pred_check
        %p128 = pneg %p29
      $region26: #{conv_transpose_block.1} parent=23 // pred_check_branch
        %130 = sbr.rel (%p128) target = $region28
      $region27: #{conv_transpose_block.1} parent=23 // pred_region
        %p131 = scmp.lt.s32.totalorder %s9, 1
        %s132 = scalar_select %p131, %s9, 1
        %s133 = smul.addr %s132, 4
        %s134 = smul.addr %s133, 4
        %s135 = scalar_lea.vmem %s0, %s134
      $region28: #{conv_transpose_block.1} parent=23 // pred_fallthru
        _
    $region24: #{conv_transpose_block.1} parent=5 // pred_fallthru
      _
    %p136 = scmp.le.s32.totalorder 1, %s9
    %p137 = scmp.lt.s32.totalorder %s9, 3
    %p138 = pnand %p136, %p137
    %p139 = pneg %p138
    // Predicated region
    $region29: #{conv_transpose_block.1} parent=5 // pred_check
      _
    $region30: #{conv_transpose_block.1} parent=5 // pred_check_branch
      %141 = sbr.rel (%p138) target = $region32
    $region31: #{conv_transpose_block.1} parent=5 // pred_region
      %s142 = ssub.s32 %s9, 1
      %p143 = scmp.lt.s32.totalorder %s14, 1
      %s144 = scalar_select %p143, %s14, 1
      %s145 = smul.addr %s144, 4
      %s146 = smul.addr %s145, 4
      %s147 = scalar_lea.vmem %s0, %s146
      %p148 = pneg %p35
      %p149 = pneg %p32
      %p150 = pneg %p56
      %p151 = pneg %p53
      %p152 = pneg %p77
      %p153 = pneg %p74
      %p154 = pneg %p103
      %p155 = pneg %p100
      %p156 = scmp.lt.s32.totalorder %s14, 1
      %s157 = scalar_select %p156, %s14, 1
      %s158 = smul.addr %s157, 3
      %s159 = smul.addr %s158, 4
      %s160 = scalar_lea.vmem %s3, %s159
      %p161 = scmp.lt.s32.totalorder %s14, 1
      %s162 = scalar_select %p161, %s14, 1
      %s163 = smul.addr %s162, 4
      %s164 = smul.addr %s163, 4
      %s165 = scalar_lea.vmem %s0, %s164
      %p166 = scmp.lt.s32.totalorder %s14, 1
      %s167 = scalar_select %p166, %s14, 1
      %s168 = smul.addr %s167, 3
      %s169 = smul.addr %s168, 4
      %s170 = scalar_lea.vmem %s3, %s169
      %v171 = vld [vmem:[%s1] sm:$0xf]
      %v172 = vld [vmem:[%s165] sm:$0xff]
      %v173 = vld [vmem:[%s165 + $0x8] sm:$0xf]
      %s174 = scalar_lea.vmem %s1, 4
      %v175 = vld [vmem:[%s174] sm:$0xf]
      %v178 = vcombine.high %v172, %v172
      %179 = vrot.lane.b32.xlu0 %v172, 127
      %v180 = vpop.permute.xlu0 %179
      %181 = vrot.lane.b32.xlu0 %v178, 127
      %v182 = vpop.permute.xlu0 %181
      %183 = vrot.lane.b32.xlu0 %v173, 127
      %v184 = vpop.permute.xlu0 %183
      %vm185 = vcmask 1039360
      %v186 = vsel %vm185, %v180, %v182
      %v187 = vsel %vm185, %v182, %v184
      %vm188 = vcmask 31744
      %v190 = vsel %vm188, %v175, 0
      %vm192 = vcmask 1043456
      %v193 = vsel %vm192, %v186, 0
      %v195 = vsel %vm192, %v187, 0
      %v197 = vsel %vm192, %v184, 0
      %199 = vmatprep.subr.mxu0 0.0
      %200 = vmatpush1.msra.mxu0 0.0
      %201 = vmatprep.subr.mxu0 0.0
      %202 = vmatpush1.msra.mxu0 0.0
      %203 = vmatprep.subr.mxu0 0.0
      %204 = vmatpush1.msra.mxu0 0.0
      %205 = vmatprep.subr.mxu0 0.0
      %206 = vmatpush1.msra.mxu0 0.0
      %207 = vmatprep.subr.mxu0 0.0
      %208 = vmatpush1.msra.mxu0 0.0
      %209 = vmatprep.subr.mxu0 0.0
      %210 = vmatpush1.msra.mxu0 0.0
      %211 = vmatprep.subr.mxu0 0.0
      %212 = vmatpush1.msra.mxu0 0.0
      %213 = vmatprep.subr.mxu0 0.0
      %214 = vmatpush1.msra.mxu0 0.0
      %215 = vmatprep.subr.mxu0 0.0
      %216 = vmatpush1.msra.mxu0 0.0
      %217 = vmatprep.subr.mxu0 0.0
      %218 = vmatpush1.msra.mxu0 0.0
      %219 = vmatprep.subr.mxu0 0.0
      %220 = vmatpush1.msra.mxu0 0.0
      %221 = vmatprep.subr.mxu0 0.0
      %222 = vmatpush1.msra.mxu0 0.0
      %223 = vmatprep.subr.mxu0 0.0
      %224 = vmatpush1.msra.mxu0 0.0
      %225 = vmatprep.subr.mxu0 0.0
      %226 = vmatpush1.msra.mxu0 0.0
      %227 = vmatprep.subr.mxu0 0.0
      %228 = vmatpush1.msra.mxu0 0.0
      %229 = vmatprep.subr.mxu0 %v195
      %230 = vmatpush1.msra.mxu0 %v193
      %231 = vmatprep.subr.mxu0 0.0
      %232 = vmatpush2.msra.mxu0 0.0
      %233 = vmatprep.subr.mxu0 0.0
      %234 = vmatpush2.msra.mxu0 0.0
      %235 = vmatprep.subr.mxu0 0.0
      %236 = vmatpush2.msra.mxu0 0.0
      %237 = vmatprep.subr.mxu0 0.0
      %238 = vmatpush2.msra.mxu0 0.0
      %239 = vmatprep.subr.mxu0 0.0
      %240 = vmatpush2.msra.mxu0 0.0
      %241 = vmatprep.subr.mxu0 0.0
      %242 = vmatpush2.msra.mxu0 0.0
      %243 = vmatprep.subr.mxu0 0.0
      %244 = vmatpush2.msra.mxu0 0.0
      %245 = vmatprep.subr.mxu0 0.0
      %246 = vmatpush2.msra.mxu0 0.0
      %247 = vmatprep.subr.mxu0 0.0
      %248 = vmatpush2.msra.mxu0 0.0
      %249 = vmatprep.subr.mxu0 0.0
      %250 = vmatpush2.msra.mxu0 0.0
      %251 = vmatprep.subr.mxu0 0.0
      %252 = vmatpush2.msra.mxu0 0.0
      %253 = vmatprep.subr.mxu0 0.0
      %254 = vmatpush2.msra.mxu0 0.0
      %255 = vmatprep.subr.mxu0 0.0
      %256 = vmatpush2.msra.mxu0 0.0
      %257 = vmatprep.subr.mxu0 0.0
      %258 = vmatpush2.msra.mxu0 0.0
      %259 = vmatprep.subr.mxu0 0.0
      %260 = vmatpush2.msra.mxu0 0.0
      %261 = vmatprep.subr.mxu0 0.0
      %262 = vmatpush2.msra.mxu0 0.0
      %263 = vmatprep.mubr.f32.mxu0 0.0
      %264 = vmatmul.mubr.f32.gmra.mxu0 %v190
      %v265 = vpop.f32.mrf.mxu0
      %v266 = vadd.f32 0.0, %v265
      %v267 = vpop.f32.mrf.mxu0
      %v268 = vadd.f32 0.0, %v267
      %269 = vdwg.mxu0
      %270 = vmatprep.subr.mxu0 0.0
      %271 = vmatpush1.msra.mxu0 0.0
      %272 = vmatprep.subr.mxu0 0.0
      %273 = vmatpush1.msra.mxu0 0.0
      %274 = vmatprep.subr.mxu0 0.0
      %275 = vmatpush1.msra.mxu0 0.0
      %276 = vmatprep.subr.mxu0 0.0
      %277 = vmatpush1.msra.mxu0 0.0
      %278 = vmatprep.subr.mxu0 0.0
      %279 = vmatpush1.msra.mxu0 0.0
      %280 = vmatprep.subr.mxu0 0.0
      %281 = vmatpush1.msra.mxu0 0.0
      %282 = vmatprep.subr.mxu0 0.0
      %283 = vmatpush1.msra.mxu0 0.0
      %284 = vmatprep.subr.mxu0 0.0
      %285 = vmatpush1.msra.mxu0 0.0
      %286 = vmatprep.subr.mxu0 0.0
      %287 = vmatpush1.msra.mxu0 0.0
      %288 = vmatprep.subr.mxu0 0.0
      %289 = vmatpush1.msra.mxu0 0.0
      %290 = vmatprep.subr.mxu0 0.0
      %291 = vmatpush1.msra.mxu0 0.0
      %292 = vmatprep.subr.mxu0 0.0
      %293 = vmatpush1.msra.mxu0 0.0
      %294 = vmatprep.subr.mxu0 0.0
      %295 = vmatpush1.msra.mxu0 0.0
      %296 = vmatprep.subr.mxu0 0.0
      %297 = vmatpush1.msra.mxu0 0.0
      %298 = vmatprep.subr.mxu0 0.0
      %299 = vmatpush1.msra.mxu0 0.0
      %300 = vmatprep.subr.mxu0 0.0
      %301 = vmatpush1.msra.mxu0 %v197
      %302 = vmatprep.subr.mxu0 0.0
      %303 = vmatpush2.msra.mxu0 0.0
      %304 = vmatprep.subr.mxu0 0.0
      %305 = vmatpush2.msra.mxu0 0.0
      %306 = vmatprep.subr.mxu0 0.0
      %307 = vmatpush2.msra.mxu0 0.0
      %308 = vmatprep.subr.mxu0 0.0
      %309 = vmatpush2.msra.mxu0 0.0
      %310 = vmatprep.subr.mxu0 0.0
      %311 = vmatpush2.msra.mxu0 0.0
      %312 = vmatprep.subr.mxu0 0.0
      %313 = vmatpush2.msra.mxu0 0.0
      %314 = vmatprep.subr.mxu0 0.0
      %315 = vmatpush2.msra.mxu0 0.0
      %316 = vmatprep.subr.mxu0 0.0
      %317 = vmatpush2.msra.mxu0 0.0
      %318 = vmatprep.subr.mxu0 0.0
      %319 = vmatpush2.msra.mxu0 0.0
      %320 = vmatprep.subr.mxu0 0.0
      %321 = vmatpush2.msra.mxu0 0.0
      %322 = vmatprep.subr.mxu0 0.0
      %323 = vmatpush2.msra.mxu0 0.0
      %324 = vmatprep.subr.mxu0 0.0
      %325 = vmatpush2.msra.mxu0 0.0
      %326 = vmatprep.subr.mxu0 0.0
      %327 = vmatpush2.msra.mxu0 0.0
      %328 = vmatprep.subr.mxu0 0.0
      %329 = vmatpush2.msra.mxu0 0.0
      %330 = vmatprep.subr.mxu0 0.0
      %331 = vmatpush2.msra.mxu0 0.0
      %332 = vmatprep.subr.mxu0 0.0
      %333 = vmatpush2.msra.mxu0 0.0
      %334 = vmatprep.mubr.f32.mxu0 0.0
      %335 = vmatmul.mubr.f32.gmra.mxu0 %v190
      %v336 = vpop.f32.mrf.mxu0
      %v337 = vadd.f32 0.0, %v336
      %v338 = vpop.f32.mrf.mxu0
      %339 = vdwg.mxu0
      %v341 = vsel %vm188, %v171, 0
      %v343 = vsel %vm192, %v172, 0
      %v345 = vsel %vm192, %v178, 0
      %v347 = vsel %vm192, %v173, 0
      %349 = vmatprep.subr.mxu0 0.0
      %350 = vmatpush1.msra.mxu0 0.0
      %351 = vmatprep.subr.mxu0 0.0
      %352 = vmatpush1.msra.mxu0 0.0
      %353 = vmatprep.subr.mxu0 0.0
      %354 = vmatpush1.msra.mxu0 0.0
      %355 = vmatprep.subr.mxu0 0.0
      %356 = vmatpush1.msra.mxu0 0.0
      %357 = vmatprep.subr.mxu0 0.0
      %358 = vmatpush1.msra.mxu0 0.0
      %359 = vmatprep.subr.mxu0 0.0
      %360 = vmatpush1.msra.mxu0 0.0
      %361 = vmatprep.subr.mxu0 0.0
      %362 = vmatpush1.msra.mxu0 0.0
      %363 = vmatprep.subr.mxu0 0.0
      %364 = vmatpush1.msra.mxu0 0.0
      %365 = vmatprep.subr.mxu0 0.0
      %366 = vmatpush1.msra.mxu0 0.0
      %367 = vmatprep.subr.mxu0 0.0
      %368 = vmatpush1.msra.mxu0 0.0
      %369 = vmatprep.subr.mxu0 0.0
      %370 = vmatpush1.msra.mxu0 0.0
      %371 = vmatprep.subr.mxu0 0.0
      %372 = vmatpush1.msra.mxu0 0.0
      %373 = vmatprep.subr.mxu0 0.0
      %374 = vmatpush1.msra.mxu0 0.0
      %375 = vmatprep.subr.mxu0 0.0
      %376 = vmatpush1.msra.mxu0 0.0
      %377 = vmatprep.subr.mxu0 0.0
      %378 = vmatpush1.msra.mxu0 0.0
      %379 = vmatprep.subr.mxu0 %v345
      %380 = vmatpush1.msra.mxu0 %v343
      %381 = vmatprep.subr.mxu0 0.0
      %382 = vmatpush2.msra.mxu0 0.0
      %383 = vmatprep.subr.mxu0 0.0
      %384 = vmatpush2.msra.mxu0 0.0
      %385 = vmatprep.subr.mxu0 0.0
      %386 = vmatpush2.msra.mxu0 0.0
      %387 = vmatprep.subr.mxu0 0.0
      %388 = vmatpush2.msra.mxu0 0.0
      %389 = vmatprep.subr.mxu0 0.0
      %390 = vmatpush2.msra.mxu0 0.0
      %391 = vmatprep.subr.mxu0 0.0
      %392 = vmatpush2.msra.mxu0 0.0
      %393 = vmatprep.subr.mxu0 0.0
      %394 = vmatpush2.msra.mxu0 0.0
      %395 = vmatprep.subr.mxu0 0.0
      %396 = vmatpush2.msra.mxu0 0.0
      %397 = vmatprep.subr.mxu0 0.0
      %398 = vmatpush2.msra.mxu0 0.0
      %399 = vmatprep.subr.mxu0 0.0
      %400 = vmatpush2.msra.mxu0 0.0
      %401 = vmatprep.subr.mxu0 0.0
      %402 = vmatpush2.msra.mxu0 0.0
      %403 = vmatprep.subr.mxu0 0.0
      %404 = vmatpush2.msra.mxu0 0.0
      %405 = vmatprep.subr.mxu0 0.0
      %406 = vmatpush2.msra.mxu0 0.0
      %407 = vmatprep.subr.mxu0 0.0
      %408 = vmatpush2.msra.mxu0 0.0
      %409 = vmatprep.subr.mxu0 0.0
      %410 = vmatpush2.msra.mxu0 0.0
      %411 = vmatprep.subr.mxu0 0.0
      %412 = vmatpush2.msra.mxu0 0.0
      %413 = vmatprep.mubr.f32.mxu0 0.0
      %414 = vmatmul.mubr.f32.gmra.mxu0 %v341
      %v415 = vpop.f32.mrf.mxu0
      %v416 = vadd.f32 %v266, %v415
      %v417 = vpop.f32.mrf.mxu0
      %v418 = vadd.f32 %v268, %v417
      %419 = vdwg.mxu0
      %420 = vmatprep.subr.mxu0 0.0
      %421 = vmatpush1.msra.mxu0 0.0
      %422 = vmatprep.subr.mxu0 0.0
      %423 = vmatpush1.msra.mxu0 0.0
      %424 = vmatprep.subr.mxu0 0.0
      %425 = vmatpush1.msra.mxu0 0.0
      %426 = vmatprep.subr.mxu0 0.0
      %427 = vmatpush1.msra.mxu0 0.0
      %428 = vmatprep.subr.mxu0 0.0
      %429 = vmatpush1.msra.mxu0 0.0
      %430 = vmatprep.subr.mxu0 0.0
      %431 = vmatpush1.msra.mxu0 0.0
      %432 = vmatprep.subr.mxu0 0.0
      %433 = vmatpush1.msra.mxu0 0.0
      %434 = vmatprep.subr.mxu0 0.0
      %435 = vmatpush1.msra.mxu0 0.0
      %436 = vmatprep.subr.mxu0 0.0
      %437 = vmatpush1.msra.mxu0 0.0
      %438 = vmatprep.subr.mxu0 0.0
      %439 = vmatpush1.msra.mxu0 0.0
      %440 = vmatprep.subr.mxu0 0.0
      %441 = vmatpush1.msra.mxu0 0.0
      %442 = vmatprep.subr.mxu0 0.0
      %443 = vmatpush1.msra.mxu0 0.0
      %444 = vmatprep.subr.mxu0 0.0
      %445 = vmatpush1.msra.mxu0 0.0
      %446 = vmatprep.subr.mxu0 0.0
      %447 = vmatpush1.msra.mxu0 0.0
      %448 = vmatprep.subr.mxu0 0.0
      %449 = vmatpush1.msra.mxu0 0.0
      %450 = vmatprep.subr.mxu0 0.0
      %451 = vmatpush1.msra.mxu0 %v347
      %452 = vmatprep.subr.mxu0 0.0
      %453 = vmatpush2.msra.mxu0 0.0
      %454 = vmatprep.subr.mxu0 0.0
      %455 = vmatpush2.msra.mxu0 0.0
      %456 = vmatprep.subr.mxu0 0.0
      %457 = vmatpush2.msra.mxu0 0.0
      %458 = vmatprep.subr.mxu0 0.0
      %459 = vmatpush2.msra.mxu0 0.0
      %460 = vmatprep.subr.mxu0 0.0
      %461 = vmatpush2.msra.mxu0 0.0
      %462 = vmatprep.subr.mxu0 0.0
      %463 = vmatpush2.msra.mxu0 0.0
      %464 = vmatprep.subr.mxu0 0.0
      %465 = vmatpush2.msra.mxu0 0.0
      %466 = vmatprep.subr.mxu0 0.0
      %467 = vmatpush2.msra.mxu0 0.0
      %468 = vmatprep.subr.mxu0 0.0
      %469 = vmatpush2.msra.mxu0 0.0
      %470 = vmatprep.subr.mxu0 0.0
      %471 = vmatpush2.msra.mxu0 0.0
      %472 = vmatprep.subr.mxu0 0.0
      %473 = vmatpush2.msra.mxu0 0.0
      %474 = vmatprep.subr.mxu0 0.0
      %475 = vmatpush2.msra.mxu0 0.0
      %476 = vmatprep.subr.mxu0 0.0
      %477 = vmatpush2.msra.mxu0 0.0
      %478 = vmatprep.subr.mxu0 0.0
      %479 = vmatpush2.msra.mxu0 0.0
      %480 = vmatprep.subr.mxu0 0.0
      %481 = vmatpush2.msra.mxu0 0.0
      %482 = vmatprep.subr.mxu0 0.0
      %483 = vmatpush2.msra.mxu0 0.0
      %484 = vmatprep.mubr.f32.mxu0 0.0
      %485 = vmatmul.mubr.f32.gmra.mxu0 %v341
      %v486 = vpop.f32.mrf.mxu0
      %v487 = vadd.f32 %v337, %v486
      %v488 = vpop.f32.mrf.mxu0
      %489 = vdwg.mxu0
      %s490 = scalar_lea.vmem %s1, 8
      %v491 = vld [vmem:[%s490] sm:$0xf]
      %v492 = vld [vmem:[%s165] sm:$0xff]
      %v493 = vld [vmem:[%s165 + $0x8] sm:$0xf]
      %v496 = vcombine.high %v492, %v492
      %497 = vrot.lane.b32.xlu0 %v492, 126
      %v498 = vpop.permute.xlu0 %497
      %499 = vrot.lane.b32.xlu0 %v496, 126
      %v500 = vpop.permute.xlu0 %499
      %501 = vrot.lane.b32.xlu0 %v493, 126
      %v502 = vpop.permute.xlu0 %501
      %vm503 = vcmask 1031168
      %v504 = vsel %vm503, %v498, %v500
      %v505 = vsel %vm503, %v500, %v502
      %v507 = vsel %vm188, %v491, 0
      %v509 = vsel %vm192, %v504, 0
      %v511 = vsel %vm192, %v505, 0
      %v513 = vsel %vm192, %v502, 0
      %515 = vmatprep.subr.mxu0 0.0
      %516 = vmatpush1.msra.mxu0 0.0
      %517 = vmatprep.subr.mxu0 0.0
      %518 = vmatpush1.msra.mxu0 0.0
      %519 = vmatprep.subr.mxu0 0.0
      %520 = vmatpush1.msra.mxu0 0.0
      %521 = vmatprep.subr.mxu0 0.0
      %522 = vmatpush1.msra.mxu0 0.0
      %523 = vmatprep.subr.mxu0 0.0
      %524 = vmatpush1.msra.mxu0 0.0
      %525 = vmatprep.subr.mxu0 0.0
      %526 = vmatpush1.msra.mxu0 0.0
      %527 = vmatprep.subr.mxu0 0.0
      %528 = vmatpush1.msra.mxu0 0.0
      %529 = vmatprep.subr.mxu0 0.0
      %530 = vmatpush1.msra.mxu0 0.0
      %531 = vmatprep.subr.mxu0 0.0
      %532 = vmatpush1.msra.mxu0 0.0
      %533 = vmatprep.subr.mxu0 0.0
      %534 = vmatpush1.msra.mxu0 0.0
      %535 = vmatprep.subr.mxu0 0.0
      %536 = vmatpush1.msra.mxu0 0.0
      %537 = vmatprep.subr.mxu0 0.0
      %538 = vmatpush1.msra.mxu0 0.0
      %539 = vmatprep.subr.mxu0 0.0
      %540 = vmatpush1.msra.mxu0 0.0
      %541 = vmatprep.subr.mxu0 0.0
      %542 = vmatpush1.msra.mxu0 0.0
      %543 = vmatprep.subr.mxu0 0.0
      %544 = vmatpush1.msra.mxu0 0.0
      %545 = vmatprep.subr.mxu0 %v511
      %546 = vmatpush1.msra.mxu0 %v509
      %547 = vmatprep.subr.mxu0 0.0
      %548 = vmatpush2.msra.mxu0 0.0
      %549 = vmatprep.subr.mxu0 0.0
      %550 = vmatpush2.msra.mxu0 0.0
      %551 = vmatprep.subr.mxu0 0.0
      %552 = vmatpush2.msra.mxu0 0.0
      %553 = vmatprep.subr.mxu0 0.0
      %554 = vmatpush2.msra.mxu0 0.0
      %555 = vmatprep.subr.mxu0 0.0
      %556 = vmatpush2.msra.mxu0 0.0
      %557 = vmatprep.subr.mxu0 0.0
      %558 = vmatpush2.msra.mxu0 0.0
      %559 = vmatprep.subr.mxu0 0.0
      %560 = vmatpush2.msra.mxu0 0.0
      %561 = vmatprep.subr.mxu0 0.0
      %562 = vmatpush2.msra.mxu0 0.0
      %563 = vmatprep.subr.mxu0 0.0
      %564 = vmatpush2.msra.mxu0 0.0
      %565 = vmatprep.subr.mxu0 0.0
      %566 = vmatpush2.msra.mxu0 0.0
      %567 = vmatprep.subr.mxu0 0.0
      %568 = vmatpush2.msra.mxu0 0.0
      %569 = vmatprep.subr.mxu0 0.0
      %570 = vmatpush2.msra.mxu0 0.0
      %571 = vmatprep.subr.mxu0 0.0
      %572 = vmatpush2.msra.mxu0 0.0
      %573 = vmatprep.subr.mxu0 0.0
      %574 = vmatpush2.msra.mxu0 0.0
      %575 = vmatprep.subr.mxu0 0.0
      %576 = vmatpush2.msra.mxu0 0.0
      %577 = vmatprep.subr.mxu0 0.0
      %578 = vmatpush2.msra.mxu0 0.0
      %579 = vmatprep.mubr.f32.mxu0 0.0
      %580 = vmatmul.mubr.f32.gmra.mxu0 %v507
      %v581 = vpop.f32.mrf.mxu0
      %v582 = vadd.f32 0.0, %v581
      %v583 = vpop.f32.mrf.mxu0
      %v584 = vadd.f32 0.0, %v583
      %585 = vdwg.mxu0
      %586 = vmatprep.subr.mxu0 0.0
      %587 = vmatpush1.msra.mxu0 0.0
      %588 = vmatprep.subr.mxu0 0.0
      %589 = vmatpush1.msra.mxu0 0.0
      %590 = vmatprep.subr.mxu0 0.0
      %591 = vmatpush1.msra.mxu0 0.0
      %592 = vmatprep.subr.mxu0 0.0
      %593 = vmatpush1.msra.mxu0 0.0
      %594 = vmatprep.subr.mxu0 0.0
      %595 = vmatpush1.msra.mxu0 0.0
      %596 = vmatprep.subr.mxu0 0.0
      %597 = vmatpush1.msra.mxu0 0.0
      %598 = vmatprep.subr.mxu0 0.0
      %599 = vmatpush1.msra.mxu0 0.0
      %600 = vmatprep.subr.mxu0 0.0
      %601 = vmatpush1.msra.mxu0 0.0
      %602 = vmatprep.subr.mxu0 0.0
      %603 = vmatpush1.msra.mxu0 0.0
      %604 = vmatprep.subr.mxu0 0.0
      %605 = vmatpush1.msra.mxu0 0.0
      %606 = vmatprep.subr.mxu0 0.0
      %607 = vmatpush1.msra.mxu0 0.0
      %608 = vmatprep.subr.mxu0 0.0
      %609 = vmatpush1.msra.mxu0 0.0
      %610 = vmatprep.subr.mxu0 0.0
      %611 = vmatpush1.msra.mxu0 0.0
      %612 = vmatprep.subr.mxu0 0.0
      %613 = vmatpush1.msra.mxu0 0.0
      %614 = vmatprep.subr.mxu0 0.0
      %615 = vmatpush1.msra.mxu0 0.0
      %616 = vmatprep.subr.mxu0 0.0
      %617 = vmatpush1.msra.mxu0 %v513
      %618 = vmatprep.subr.mxu0 0.0
      %619 = vmatpush2.msra.mxu0 0.0
      %620 = vmatprep.subr.mxu0 0.0
      %621 = vmatpush2.msra.mxu0 0.0
      %622 = vmatprep.subr.mxu0 0.0
      %623 = vmatpush2.msra.mxu0 0.0
      %624 = vmatprep.subr.mxu0 0.0
      %625 = vmatpush2.msra.mxu0 0.0
      %626 = vmatprep.subr.mxu0 0.0
      %627 = vmatpush2.msra.mxu0 0.0
      %628 = vmatprep.subr.mxu0 0.0
      %629 = vmatpush2.msra.mxu0 0.0
      %630 = vmatprep.subr.mxu0 0.0
      %631 = vmatpush2.msra.mxu0 0.0
      %632 = vmatprep.subr.mxu0 0.0
      %633 = vmatpush2.msra.mxu0 0.0
      %634 = vmatprep.subr.mxu0 0.0
      %635 = vmatpush2.msra.mxu0 0.0
      %636 = vmatprep.subr.mxu0 0.0
      %637 = vmatpush2.msra.mxu0 0.0
      %638 = vmatprep.subr.mxu0 0.0
      %639 = vmatpush2.msra.mxu0 0.0
      %640 = vmatprep.subr.mxu0 0.0
      %641 = vmatpush2.msra.mxu0 0.0
      %642 = vmatprep.subr.mxu0 0.0
      %643 = vmatpush2.msra.mxu0 0.0
      %644 = vmatprep.subr.mxu0 0.0
      %645 = vmatpush2.msra.mxu0 0.0
      %646 = vmatprep.subr.mxu0 0.0
      %647 = vmatpush2.msra.mxu0 0.0
      %648 = vmatprep.subr.mxu0 0.0
      %649 = vmatpush2.msra.mxu0 0.0
      %650 = vmatprep.mubr.f32.mxu0 0.0
      %651 = vmatmul.mubr.f32.gmra.mxu0 %v507
      %v652 = vpop.f32.mrf.mxu0
      %v653 = vadd.f32 0.0, %v652
      %v654 = vpop.f32.mrf.mxu0
      %655 = vdwg.mxu0
      %v656 = vadd.f32 %v416, %v582
      %v657 = vadd.f32 %v418, %v584
      %v658 = vadd.f32 %v487, %v653
      %s659 = scalar_lea.vmem %s1, 12
      %v660 = vld [vmem:[%s659] sm:$0xf]
      %v661 = vld [vmem:[%s165] sm:$0xff]
      %v662 = vld [vmem:[%s165 + $0x8] sm:$0xf]
      %v665 = vcombine.high %v661, %v661
      %666 = vrot.lane.b32.xlu0 %v661, 108
      %v667 = vpop.permute.xlu0 %666
      %668 = vrot.lane.b32.xlu0 %v665, 108
      %v669 = vpop.permute.xlu0 %668
      %670 = vrot.lane.b32.xlu0 %v662, 108
      %v671 = vpop.permute.xlu0 %670
      %vm672 = vcmask 883712
      %v673 = vsel %vm672, %v667, %v669
      %v674 = vsel %vm672, %v669, %v671
      %v676 = vsel %vm188, %v660, 0
      %v678 = vsel %vm192, %v673, 0
      %v680 = vsel %vm192, %v674, 0
      %v682 = vsel %vm192, %v671, 0
      %684 = vmatprep.subr.mxu0 0.0
      %685 = vmatpush1.msra.mxu0 0.0
      %686 = vmatprep.subr.mxu0 0.0
      %687 = vmatpush1.msra.mxu0 0.0
      %688 = vmatprep.subr.mxu0 0.0
      %689 = vmatpush1.msra.mxu0 0.0
      %690 = vmatprep.subr.mxu0 0.0
      %691 = vmatpush1.msra.mxu0 0.0
      %692 = vmatprep.subr.mxu0 0.0
      %693 = vmatpush1.msra.mxu0 0.0
      %694 = vmatprep.subr.mxu0 0.0
      %695 = vmatpush1.msra.mxu0 0.0
      %696 = vmatprep.subr.mxu0 0.0
      %697 = vmatpush1.msra.mxu0 0.0
      %698 = vmatprep.subr.mxu0 0.0
      %699 = vmatpush1.msra.mxu0 0.0
      %700 = vmatprep.subr.mxu0 0.0
      %701 = vmatpush1.msra.mxu0 0.0
      %702 = vmatprep.subr.mxu0 0.0
      %703 = vmatpush1.msra.mxu0 0.0
      %704 = vmatprep.subr.mxu0 0.0
      %705 = vmatpush1.msra.mxu0 0.0
      %706 = vmatprep.subr.mxu0 0.0
      %707 = vmatpush1.msra.mxu0 0.0
      %708 = vmatprep.subr.mxu0 0.0
      %709 = vmatpush1.msra.mxu0 0.0
      %710 = vmatprep.subr.mxu0 0.0
      %711 = vmatpush1.msra.mxu0 0.0
      %712 = vmatprep.subr.mxu0 0.0
      %713 = vmatpush1.msra.mxu0 0.0
      %714 = vmatprep.subr.mxu0 %v680
      %715 = vmatpush1.msra.mxu0 %v678
      %716 = vmatprep.subr.mxu0 0.0
      %717 = vmatpush2.msra.mxu0 0.0
      %718 = vmatprep.subr.mxu0 0.0
      %719 = vmatpush2.msra.mxu0 0.0
      %720 = vmatprep.subr.mxu0 0.0
      %721 = vmatpush2.msra.mxu0 0.0
      %722 = vmatprep.subr.mxu0 0.0
      %723 = vmatpush2.msra.mxu0 0.0
      %724 = vmatprep.subr.mxu0 0.0
      %725 = vmatpush2.msra.mxu0 0.0
      %726 = vmatprep.subr.mxu0 0.0
      %727 = vmatpush2.msra.mxu0 0.0
      %728 = vmatprep.subr.mxu0 0.0
      %729 = vmatpush2.msra.mxu0 0.0
      %730 = vmatprep.subr.mxu0 0.0
      %731 = vmatpush2.msra.mxu0 0.0
      %732 = vmatprep.subr.mxu0 0.0
      %733 = vmatpush2.msra.mxu0 0.0
      %734 = vmatprep.subr.mxu0 0.0
      %735 = vmatpush2.msra.mxu0 0.0
      %736 = vmatprep.subr.mxu0 0.0
      %737 = vmatpush2.msra.mxu0 0.0
      %738 = vmatprep.subr.mxu0 0.0
      %739 = vmatpush2.msra.mxu0 0.0
      %740 = vmatprep.subr.mxu0 0.0
      %741 = vmatpush2.msra.mxu0 0.0
      %742 = vmatprep.subr.mxu0 0.0
      %743 = vmatpush2.msra.mxu0 0.0
      %744 = vmatprep.subr.mxu0 0.0
      %745 = vmatpush2.msra.mxu0 0.0
      %746 = vmatprep.subr.mxu0 0.0
      %747 = vmatpush2.msra.mxu0 0.0
      %748 = vmatprep.mubr.f32.mxu0 0.0
      %749 = vmatmul.mubr.f32.gmra.mxu0 %v676
      %v750 = vpop.f32.mrf.mxu0
      %v751 = vadd.f32 0.0, %v750
      %v752 = vpop.f32.mrf.mxu0
      %v753 = vadd.f32 0.0, %v752
      %754 = vdwg.mxu0
      %755 = vmatprep.subr.mxu0 0.0
      %756 = vmatpush1.msra.mxu0 0.0
      %757 = vmatprep.subr.mxu0 0.0
      %758 = vmatpush1.msra.mxu0 0.0
      %759 = vmatprep.subr.mxu0 0.0
      %760 = vmatpush1.msra.mxu0 0.0
      %761 = vmatprep.subr.mxu0 0.0
      %762 = vmatpush1.msra.mxu0 0.0
      %763 = vmatprep.subr.mxu0 0.0
      %764 = vmatpush1.msra.mxu0 0.0
      %765 = vmatprep.subr.mxu0 0.0
      %766 = vmatpush1.msra.mxu0 0.0
      %767 = vmatprep.subr.mxu0 0.0
      %768 = vmatpush1.msra.mxu0 0.0
      %769 = vmatprep.subr.mxu0 0.0
      %770 = vmatpush1.msra.mxu0 0.0
      %771 = vmatprep.subr.mxu0 0.0
      %772 = vmatpush1.msra.mxu0 0.0
      %773 = vmatprep.subr.mxu0 0.0
      %774 = vmatpush1.msra.mxu0 0.0
      %775 = vmatprep.subr.mxu0 0.0
      %776 = vmatpush1.msra.mxu0 0.0
      %777 = vmatprep.subr.mxu0 0.0
      %778 = vmatpush1.msra.mxu0 0.0
      %779 = vmatprep.subr.mxu0 0.0
      %780 = vmatpush1.msra.mxu0 0.0
      %781 = vmatprep.subr.mxu0 0.0
      %782 = vmatpush1.msra.mxu0 0.0
      %783 = vmatprep.subr.mxu0 0.0
      %784 = vmatpush1.msra.mxu0 0.0
      %785 = vmatprep.subr.mxu0 0.0
      %786 = vmatpush1.msra.mxu0 %v682
      %787 = vmatprep.subr.mxu0 0.0
      %788 = vmatpush2.msra.mxu0 0.0
      %789 = vmatprep.subr.mxu0 0.0
      %790 = vmatpush2.msra.mxu0 0.0
      %791 = vmatprep.subr.mxu0 0.0
      %792 = vmatpush2.msra.mxu0 0.0
      %793 = vmatprep.subr.mxu0 0.0
      %794 = vmatpush2.msra.mxu0 0.0
      %795 = vmatprep.subr.mxu0 0.0
      %796 = vmatpush2.msra.mxu0 0.0
      %797 = vmatprep.subr.mxu0 0.0
      %798 = vmatpush2.msra.mxu0 0.0
      %799 = vmatprep.subr.mxu0 0.0
      %800 = vmatpush2.msra.mxu0 0.0
      %801 = vmatprep.subr.mxu0 0.0
      %802 = vmatpush2.msra.mxu0 0.0
      %803 = vmatprep.subr.mxu0 0.0
      %804 = vmatpush2.msra.mxu0 0.0
      %805 = vmatprep.subr.mxu0 0.0
      %806 = vmatpush2.msra.mxu0 0.0
      %807 = vmatprep.subr.mxu0 0.0
      %808 = vmatpush2.msra.mxu0 0.0
      %809 = vmatprep.subr.mxu0 0.0
      %810 = vmatpush2.msra.mxu0 0.0
      %811 = vmatprep.subr.mxu0 0.0
      %812 = vmatpush2.msra.mxu0 0.0
      %813 = vmatprep.subr.mxu0 0.0
      %814 = vmatpush2.msra.mxu0 0.0
      %815 = vmatprep.subr.mxu0 0.0
      %816 = vmatpush2.msra.mxu0 0.0
      %817 = vmatprep.subr.mxu0 0.0
      %818 = vmatpush2.msra.mxu0 0.0
      %819 = vmatprep.mubr.f32.mxu0 0.0
      %820 = vmatmul.mubr.f32.gmra.mxu0 %v676
      %v821 = vpop.f32.mrf.mxu0
      %v822 = vadd.f32 0.0, %v821
      %v823 = vpop.f32.mrf.mxu0
      %824 = vdwg.mxu0
      %v825 = vadd.f32 %v656, %v751
      %v826 = vadd.f32 %v657, %v753
      %v827 = vadd.f32 %v658, %v822
      %s828 = scalar_lea.vmem %s1, 16
      %v829 = vld [vmem:[%s828] sm:$0xf]
      %v830 = vld [vmem:[%s165] sm:$0xff]
      %v831 = vld [vmem:[%s165 + $0x8] sm:$0xf]
      %v834 = vcombine.high %v830, %v830
      %835 = vrot.lane.b32.xlu0 %v830, 107
      %v836 = vpop.permute.xlu0 %835
      %837 = vrot.lane.b32.xlu0 %v834, 107
      %v838 = vpop.permute.xlu0 %837
      %839 = vrot.lane.b32.xlu0 %v831, 107
      %v840 = vpop.permute.xlu0 %839
      %vm841 = vcmask 875520
      %v842 = vsel %vm841, %v836, %v838
      %v843 = vsel %vm841, %v838, %v840
      %v845 = vsel %vm188, %v829, 0
      %v847 = vsel %vm192, %v842, 0
      %v849 = vsel %vm192, %v843, 0
      %v851 = vsel %vm192, %v840, 0
      %853 = vmatprep.subr.mxu0 0.0
      %854 = vmatpush1.msra.mxu0 0.0
      %855 = vmatprep.subr.mxu0 0.0
      %856 = vmatpush1.msra.mxu0 0.0
      %857 = vmatprep.subr.mxu0 0.0
      %858 = vmatpush1.msra.mxu0 0.0
      %859 = vmatprep.subr.mxu0 0.0
      %860 = vmatpush1.msra.mxu0 0.0
      %861 = vmatprep.subr.mxu0 0.0
      %862 = vmatpush1.msra.mxu0 0.0
      %863 = vmatprep.subr.mxu0 0.0
      %864 = vmatpush1.msra.mxu0 0.0
      %865 = vmatprep.subr.mxu0 0.0
      %866 = vmatpush1.msra.mxu0 0.0
      %867 = vmatprep.subr.mxu0 0.0
      %868 = vmatpush1.msra.mxu0 0.0
      %869 = vmatprep.subr.mxu0 0.0
      %870 = vmatpush1.msra.mxu0 0.0
      %871 = vmatprep.subr.mxu0 0.0
      %872 = vmatpush1.msra.mxu0 0.0
      %873 = vmatprep.subr.mxu0 0.0
      %874 = vmatpush1.msra.mxu0 0.0
      %875 = vmatprep.subr.mxu0 0.0
      %876 = vmatpush1.msra.mxu0 0.0
      %877 = vmatprep.subr.mxu0 0.0
      %878 = vmatpush1.msra.mxu0 0.0
      %879 = vmatprep.subr.mxu0 0.0
      %880 = vmatpush1.msra.mxu0 0.0
      %881 = vmatprep.subr.mxu0 0.0
      %882 = vmatpush1.msra.mxu0 0.0
      %883 = vmatprep.subr.mxu0 %v849
      %884 = vmatpush1.msra.mxu0 %v847
      %885 = vmatprep.subr.mxu0 0.0
      %886 = vmatpush2.msra.mxu0 0.0
      %887 = vmatprep.subr.mxu0 0.0
      %888 = vmatpush2.msra.mxu0 0.0
      %889 = vmatprep.subr.mxu0 0.0
      %890 = vmatpush2.msra.mxu0 0.0
      %891 = vmatprep.subr.mxu0 0.0
      %892 = vmatpush2.msra.mxu0 0.0
      %893 = vmatprep.subr.mxu0 0.0
      %894 = vmatpush2.msra.mxu0 0.0
      %895 = vmatprep.subr.mxu0 0.0
      %896 = vmatpush2.msra.mxu0 0.0
      %897 = vmatprep.subr.mxu0 0.0
      %898 = vmatpush2.msra.mxu0 0.0
      %899 = vmatprep.subr.mxu0 0.0
      %900 = vmatpush2.msra.mxu0 0.0
      %901 = vmatprep.subr.mxu0 0.0
      %902 = vmatpush2.msra.mxu0 0.0
      %903 = vmatprep.subr.mxu0 0.0
      %904 = vmatpush2.msra.mxu0 0.0
      %905 = vmatprep.subr.mxu0 0.0
      %906 = vmatpush2.msra.mxu0 0.0
      %907 = vmatprep.subr.mxu0 0.0
      %908 = vmatpush2.msra.mxu0 0.0
      %909 = vmatprep.subr.mxu0 0.0
      %910 = vmatpush2.msra.mxu0 0.0
      %911 = vmatprep.subr.mxu0 0.0
      %912 = vmatpush2.msra.mxu0 0.0
      %913 = vmatprep.subr.mxu0 0.0
      %914 = vmatpush2.msra.mxu0 0.0
      %915 = vmatprep.subr.mxu0 0.0
      %916 = vmatpush2.msra.mxu0 0.0
      %917 = vmatprep.mubr.f32.mxu0 0.0
      %918 = vmatmul.mubr.f32.gmra.mxu0 %v845
      %v919 = vpop.f32.mrf.mxu0
      %v920 = vadd.f32 0.0, %v919
      %v921 = vpop.f32.mrf.mxu0
      %v922 = vadd.f32 0.0, %v921
      %923 = vdwg.mxu0
      %924 = vmatprep.subr.mxu0 0.0
      %925 = vmatpush1.msra.mxu0 0.0
      %926 = vmatprep.subr.mxu0 0.0
      %927 = vmatpush1.msra.mxu0 0.0
      %928 = vmatprep.subr.mxu0 0.0
      %929 = vmatpush1.msra.mxu0 0.0
      %930 = vmatprep.subr.mxu0 0.0
      %931 = vmatpush1.msra.mxu0 0.0
      %932 = vmatprep.subr.mxu0 0.0
      %933 = vmatpush1.msra.mxu0 0.0
      %934 = vmatprep.subr.mxu0 0.0
      %935 = vmatpush1.msra.mxu0 0.0
      %936 = vmatprep.subr.mxu0 0.0
      %937 = vmatpush1.msra.mxu0 0.0
      %938 = vmatprep.subr.mxu0 0.0
      %939 = vmatpush1.msra.mxu0 0.0
      %940 = vmatprep.subr.mxu0 0.0
      %941 = vmatpush1.msra.mxu0 0.0
      %942 = vmatprep.subr.mxu0 0.0
      %943 = vmatpush1.msra.mxu0 0.0
      %944 = vmatprep.subr.mxu0 0.0
      %945 = vmatpush1.msra.mxu0 0.0
      %946 = vmatprep.subr.mxu0 0.0
      %947 = vmatpush1.msra.mxu0 0.0
      %948 = vmatprep.subr.mxu0 0.0
      %949 = vmatpush1.msra.mxu0 0.0
      %950 = vmatprep.subr.mxu0 0.0
      %951 = vmatpush1.msra.mxu0 0.0
      %952 = vmatprep.subr.mxu0 0.0
      %953 = vmatpush1.msra.mxu0 0.0
      %954 = vmatprep.subr.mxu0 0.0
      %955 = vmatpush1.msra.mxu0 %v851
      %956 = vmatprep.subr.mxu0 0.0
      %957 = vmatpush2.msra.mxu0 0.0
      %958 = vmatprep.subr.mxu0 0.0
      %959 = vmatpush2.msra.mxu0 0.0
      %960 = vmatprep.subr.mxu0 0.0
      %961 = vmatpush2.msra.mxu0 0.0
      %962 = vmatprep.subr.mxu0 0.0
      %963 = vmatpush2.msra.mxu0 0.0
      %964 = vmatprep.subr.mxu0 0.0
      %965 = vmatpush2.msra.mxu0 0.0
      %966 = vmatprep.subr.mxu0 0.0
      %967 = vmatpush2.msra.mxu0 0.0
      %968 = vmatprep.subr.mxu0 0.0
      %969 = vmatpush2.msra.mxu0 0.0
      %970 = vmatprep.subr.mxu0 0.0
      %971 = vmatpush2.msra.mxu0 0.0
      %972 = vmatprep.subr.mxu0 0.0
      %973 = vmatpush2.msra.mxu0 0.0
      %974 = vmatprep.subr.mxu0 0.0
      %975 = vmatpush2.msra.mxu0 0.0
      %976 = vmatprep.subr.mxu0 0.0
      %977 = vmatpush2.msra.mxu0 0.0
      %978 = vmatprep.subr.mxu0 0.0
      %979 = vmatpush2.msra.mxu0 0.0
      %980 = vmatprep.subr.mxu0 0.0
      %981 = vmatpush2.msra.mxu0 0.0
      %982 = vmatprep.subr.mxu0 0.0
      %983 = vmatpush2.msra.mxu0 0.0
      %984 = vmatprep.subr.mxu0 0.0
      %985 = vmatpush2.msra.mxu0 0.0
      %986 = vmatprep.subr.mxu0 0.0
      %987 = vmatpush2.msra.mxu0 0.0
      %988 = vmatprep.mubr.f32.mxu0 0.0
      %989 = vmatmul.mubr.f32.gmra.mxu0 %v845
      %v990 = vpop.f32.mrf.mxu0
      %v991 = vadd.f32 0.0, %v990
      %v992 = vpop.f32.mrf.mxu0
      %993 = vdwg.mxu0
      %v994 = vadd.f32 %v825, %v920
      %v995 = vadd.f32 %v826, %v922
      %v996 = vadd.f32 %v827, %v991
      %s997 = scalar_lea.vmem %s1, 20
      %v998 = vld [vmem:[%s997] sm:$0xf]
      %v999 = vld [vmem:[%s165] sm:$0xff]
      %v1000 = vld [vmem:[%s165 + $0x8] sm:$0xf]
      %v1003 = vcombine.high %v999, %v999
      %1004 = vrot.lane.b32.xlu0 %v999, 106
      %v1005 = vpop.permute.xlu0 %1004
      %1006 = vrot.lane.b32.xlu0 %v1003, 106
      %v1007 = vpop.permute.xlu0 %1006
      %1008 = vrot.lane.b32.xlu0 %v1000, 106
      %v1009 = vpop.permute.xlu0 %1008
      %vm1010 = vcmask 867328
      %v1011 = vsel %vm1010, %v1005, %v1007
      %v1012 = vsel %vm1010, %v1007, %v1009
      %v1014 = vsel %vm188, %v998, 0
      %v1016 = vsel %vm192, %v1011, 0
      %v1018 = vsel %vm192, %v1012, 0
      %v1020 = vsel %vm192, %v1009, 0
      %1022 = vmatprep.subr.mxu0 0.0
      %1023 = vmatpush1.msra.mxu0 0.0
      %1024 = vmatprep.subr.mxu0 0.0
      %1025 = vmatpush1.msra.mxu0 0.0
      %1026 = vmatprep.subr.mxu0 0.0
      %1027 = vmatpush1.msra.mxu0 0.0
      %1028 = vmatprep.subr.mxu0 0.0
      %1029 = vmatpush1.msra.mxu0 0.0
      %1030 = vmatprep.subr.mxu0 0.0
      %1031 = vmatpush1.msra.mxu0 0.0
      %1032 = vmatprep.subr.mxu0 0.0
      %1033 = vmatpush1.msra.mxu0 0.0
      %1034 = vmatprep.subr.mxu0 0.0
      %1035 = vmatpush1.msra.mxu0 0.0
      %1036 = vmatprep.subr.mxu0 0.0
      %1037 = vmatpush1.msra.mxu0 0.0
      %1038 = vmatprep.subr.mxu0 0.0
      %1039 = vmatpush1.msra.mxu0 0.0
      %1040 = vmatprep.subr.mxu0 0.0
      %1041 = vmatpush1.msra.mxu0 0.0
      %1042 = vmatprep.subr.mxu0 0.0
      %1043 = vmatpush1.msra.mxu0 0.0
      %1044 = vmatprep.subr.mxu0 0.0
      %1045 = vmatpush1.msra.mxu0 0.0
      %1046 = vmatprep.subr.mxu0 0.0
      %1047 = vmatpush1.msra.mxu0 0.0
      %1048 = vmatprep.subr.mxu0 0.0
      %1049 = vmatpush1.msra.mxu0 0.0
      %1050 = vmatprep.subr.mxu0 0.0
      %1051 = vmatpush1.msra.mxu0 0.0
      %1052 = vmatprep.subr.mxu0 %v1018
      %1053 = vmatpush1.msra.mxu0 %v1016
      %1054 = vmatprep.subr.mxu0 0.0
      %1055 = vmatpush2.msra.mxu0 0.0
      %1056 = vmatprep.subr.mxu0 0.0
      %1057 = vmatpush2.msra.mxu0 0.0
      %1058 = vmatprep.subr.mxu0 0.0
      %1059 = vmatpush2.msra.mxu0 0.0
      %1060 = vmatprep.subr.mxu0 0.0
      %1061 = vmatpush2.msra.mxu0 0.0
      %1062 = vmatprep.subr.mxu0 0.0
      %1063 = vmatpush2.msra.mxu0 0.0
      %1064 = vmatprep.subr.mxu0 0.0
      %1065 = vmatpush2.msra.mxu0 0.0
      %1066 = vmatprep.subr.mxu0 0.0
      %1067 = vmatpush2.msra.mxu0 0.0
      %1068 = vmatprep.subr.mxu0 0.0
      %1069 = vmatpush2.msra.mxu0 0.0
      %1070 = vmatprep.subr.mxu0 0.0
      %1071 = vmatpush2.msra.mxu0 0.0
      %1072 = vmatprep.subr.mxu0 0.0
      %1073 = vmatpush2.msra.mxu0 0.0
      %1074 = vmatprep.subr.mxu0 0.0
      %1075 = vmatpush2.msra.mxu0 0.0
      %1076 = vmatprep.subr.mxu0 0.0
      %1077 = vmatpush2.msra.mxu0 0.0
      %1078 = vmatprep.subr.mxu0 0.0
      %1079 = vmatpush2.msra.mxu0 0.0
      %1080 = vmatprep.subr.mxu0 0.0
      %1081 = vmatpush2.msra.mxu0 0.0
      %1082 = vmatprep.subr.mxu0 0.0
      %1083 = vmatpush2.msra.mxu0 0.0
      %1084 = vmatprep.subr.mxu0 0.0
      %1085 = vmatpush2.msra.mxu0 0.0
      %1086 = vmatprep.mubr.f32.mxu0 0.0
      %1087 = vmatmul.mubr.f32.gmra.mxu0 %v1014
      %v1088 = vpop.f32.mrf.mxu0
      %v1089 = vadd.f32 0.0, %v1088
      %v1090 = vpop.f32.mrf.mxu0
      %v1091 = vadd.f32 0.0, %v1090
      %1092 = vdwg.mxu0
      %1093 = vmatprep.subr.mxu0 0.0
      %1094 = vmatpush1.msra.mxu0 0.0
      %1095 = vmatprep.subr.mxu0 0.0
      %1096 = vmatpush1.msra.mxu0 0.0
      %1097 = vmatprep.subr.mxu0 0.0
      %1098 = vmatpush1.msra.mxu0 0.0
      %1099 = vmatprep.subr.mxu0 0.0
      %1100 = vmatpush1.msra.mxu0 0.0
      %1101 = vmatprep.subr.mxu0 0.0
      %1102 = vmatpush1.msra.mxu0 0.0
      %1103 = vmatprep.subr.mxu0 0.0
      %1104 = vmatpush1.msra.mxu0 0.0
      %1105 = vmatprep.subr.mxu0 0.0
      %1106 = vmatpush1.msra.mxu0 0.0
      %1107 = vmatprep.subr.mxu0 0.0
      %1108 = vmatpush1.msra.mxu0 0.0
      %1109 = vmatprep.subr.mxu0 0.0
      %1110 = vmatpush1.msra.mxu0 0.0
      %1111 = vmatprep.subr.mxu0 0.0
      %1112 = vmatpush1.msra.mxu0 0.0
      %1113 = vmatprep.subr.mxu0 0.0
      %1114 = vmatpush1.msra.mxu0 0.0
      %1115 = vmatprep.subr.mxu0 0.0
      %1116 = vmatpush1.msra.mxu0 0.0
      %1117 = vmatprep.subr.mxu0 0.0
      %1118 = vmatpush1.msra.mxu0 0.0
      %1119 = vmatprep.subr.mxu0 0.0
      %1120 = vmatpush1.msra.mxu0 0.0
      %1121 = vmatprep.subr.mxu0 0.0
      %1122 = vmatpush1.msra.mxu0 0.0
      %1123 = vmatprep.subr.mxu0 0.0
      %1124 = vmatpush1.msra.mxu0 %v1020
      %1125 = vmatprep.subr.mxu0 0.0
      %1126 = vmatpush2.msra.mxu0 0.0
      %1127 = vmatprep.subr.mxu0 0.0
      %1128 = vmatpush2.msra.mxu0 0.0
      %1129 = vmatprep.subr.mxu0 0.0
      %1130 = vmatpush2.msra.mxu0 0.0
      %1131 = vmatprep.subr.mxu0 0.0
      %1132 = vmatpush2.msra.mxu0 0.0
      %1133 = vmatprep.subr.mxu0 0.0
      %1134 = vmatpush2.msra.mxu0 0.0
      %1135 = vmatprep.subr.mxu0 0.0
      %1136 = vmatpush2.msra.mxu0 0.0
      %1137 = vmatprep.subr.mxu0 0.0
      %1138 = vmatpush2.msra.mxu0 0.0
      %1139 = vmatprep.subr.mxu0 0.0
      %1140 = vmatpush2.msra.mxu0 0.0
      %1141 = vmatprep.subr.mxu0 0.0
      %1142 = vmatpush2.msra.mxu0 0.0
      %1143 = vmatprep.subr.mxu0 0.0
      %1144 = vmatpush2.msra.mxu0 0.0
      %1145 = vmatprep.subr.mxu0 0.0
      %1146 = vmatpush2.msra.mxu0 0.0
      %1147 = vmatprep.subr.mxu0 0.0
      %1148 = vmatpush2.msra.mxu0 0.0
      %1149 = vmatprep.subr.mxu0 0.0
      %1150 = vmatpush2.msra.mxu0 0.0
      %1151 = vmatprep.subr.mxu0 0.0
      %1152 = vmatpush2.msra.mxu0 0.0
      %1153 = vmatprep.subr.mxu0 0.0
      %1154 = vmatpush2.msra.mxu0 0.0
      %1155 = vmatprep.subr.mxu0 0.0
      %1156 = vmatpush2.msra.mxu0 0.0
      %1157 = vmatprep.mubr.f32.mxu0 0.0
      %1158 = vmatmul.mubr.f32.gmra.mxu0 %v1014
      %v1159 = vpop.f32.mrf.mxu0
      %v1160 = vadd.f32 0.0, %v1159
      %v1161 = vpop.f32.mrf.mxu0
      %1162 = vdwg.mxu0
      %v1163 = vadd.f32 %v994, %v1089
      %v1164 = vadd.f32 %v995, %v1091
      %v1165 = vadd.f32 %v996, %v1160
      %s1166 = scalar_lea.vmem %s1, 24
      %v1167 = vld [vmem:[%s1166] sm:$0xf]
      %v1168 = vld [vmem:[%s165] sm:$0xff]
      %v1169 = vld [vmem:[%s165 + $0x8] sm:$0xff]
      %v1172 = vcombine.high %v1168, %v1168
      %v1173 = vcombine.high %v1169, %v1169
      %1174 = vrot.lane.b32.xlu0 %v1168, 88
      %v1175 = vpop.permute.xlu0 %1174
      %1176 = vrot.lane.b32.xlu0 %v1172, 88
      %v1177 = vpop.permute.xlu0 %1176
      %1178 = vrot.lane.b32.xlu0 %v1169, 88
      %v1179 = vpop.permute.xlu0 %1178
      %1180 = vrot.lane.b32.xlu0 %v1173, 88
      %v1181 = vpop.permute.xlu0 %1180
      %vm1182 = vcmask 719872
      %v1183 = vsel %vm1182, %v1175, %v1177
      %v1184 = vsel %vm1182, %v1177, %v1179
      %v1185 = vsel %vm1182, %v1179, %v1181
      %v1187 = vsel %vm188, %v1167, 0
      %v1189 = vsel %vm192, %v1183, 0
      %v1191 = vsel %vm192, %v1184, 0
      %v1193 = vsel %vm192, %v1185, 0
      %1195 = vmatprep.subr.mxu0 0.0
      %1196 = vmatpush1.msra.mxu0 0.0
      %1197 = vmatprep.subr.mxu0 0.0
      %1198 = vmatpush1.msra.mxu0 0.0
      %1199 = vmatprep.subr.mxu0 0.0
      %1200 = vmatpush1.msra.mxu0 0.0
      %1201 = vmatprep.subr.mxu0 0.0
      %1202 = vmatpush1.msra.mxu0 0.0
      %1203 = vmatprep.subr.mxu0 0.0
      %1204 = vmatpush1.msra.mxu0 0.0
      %1205 = vmatprep.subr.mxu0 0.0
      %1206 = vmatpush1.msra.mxu0 0.0
      %1207 = vmatprep.subr.mxu0 0.0
      %1208 = vmatpush1.msra.mxu0 0.0
      %1209 = vmatprep.subr.mxu0 0.0
      %1210 = vmatpush1.msra.mxu0 0.0
      %1211 = vmatprep.subr.mxu0 0.0
      %1212 = vmatpush1.msra.mxu0 0.0
      %1213 = vmatprep.subr.mxu0 0.0
      %1214 = vmatpush1.msra.mxu0 0.0
      %1215 = vmatprep.subr.mxu0 0.0
      %1216 = vmatpush1.msra.mxu0 0.0
      %1217 = vmatprep.subr.mxu0 0.0
      %1218 = vmatpush1.msra.mxu0 0.0
      %1219 = vmatprep.subr.mxu0 0.0
      %1220 = vmatpush1.msra.mxu0 0.0
      %1221 = vmatprep.subr.mxu0 0.0
      %1222 = vmatpush1.msra.mxu0 0.0
      %1223 = vmatprep.subr.mxu0 0.0
      %1224 = vmatpush1.msra.mxu0 0.0
      %1225 = vmatprep.subr.mxu0 %v1191
      %1226 = vmatpush1.msra.mxu0 %v1189
      %1227 = vmatprep.subr.mxu0 0.0
      %1228 = vmatpush2.msra.mxu0 0.0
      %1229 = vmatprep.subr.mxu0 0.0
      %1230 = vmatpush2.msra.mxu0 0.0
      %1231 = vmatprep.subr.mxu0 0.0
      %1232 = vmatpush2.msra.mxu0 0.0
      %1233 = vmatprep.subr.mxu0 0.0
      %1234 = vmatpush2.msra.mxu0 0.0
      %1235 = vmatprep.subr.mxu0 0.0
      %1236 = vmatpush2.msra.mxu0 0.0
      %1237 = vmatprep.subr.mxu0 0.0
      %1238 = vmatpush2.msra.mxu0 0.0
      %1239 = vmatprep.subr.mxu0 0.0
      %1240 = vmatpush2.msra.mxu0 0.0
      %1241 = vmatprep.subr.mxu0 0.0
      %1242 = vmatpush2.msra.mxu0 0.0
      %1243 = vmatprep.subr.mxu0 0.0
      %1244 = vmatpush2.msra.mxu0 0.0
      %1245 = vmatprep.subr.mxu0 0.0
      %1246 = vmatpush2.msra.mxu0 0.0
      %1247 = vmatprep.subr.mxu0 0.0
      %1248 = vmatpush2.msra.mxu0 0.0
      %1249 = vmatprep.subr.mxu0 0.0
      %1250 = vmatpush2.msra.mxu0 0.0
      %1251 = vmatprep.subr.mxu0 0.0
      %1252 = vmatpush2.msra.mxu0 0.0
      %1253 = vmatprep.subr.mxu0 0.0
      %1254 = vmatpush2.msra.mxu0 0.0
      %1255 = vmatprep.subr.mxu0 0.0
      %1256 = vmatpush2.msra.mxu0 0.0
      %1257 = vmatprep.subr.mxu0 0.0
      %1258 = vmatpush2.msra.mxu0 0.0
      %1259 = vmatprep.mubr.f32.mxu0 0.0
      %1260 = vmatmul.mubr.f32.gmra.mxu0 %v1187
      %v1261 = vpop.f32.mrf.mxu0
      %v1262 = vadd.f32 0.0, %v1261
      %v1263 = vpop.f32.mrf.mxu0
      %v1264 = vadd.f32 0.0, %v1263
      %1265 = vdwg.mxu0
      %1266 = vmatprep.subr.mxu0 0.0
      %1267 = vmatpush1.msra.mxu0 0.0
      %1268 = vmatprep.subr.mxu0 0.0
      %1269 = vmatpush1.msra.mxu0 0.0
      %1270 = vmatprep.subr.mxu0 0.0
      %1271 = vmatpush1.msra.mxu0 0.0
      %1272 = vmatprep.subr.mxu0 0.0
      %1273 = vmatpush1.msra.mxu0 0.0
      %1274 = vmatprep.subr.mxu0 0.0
      %1275 = vmatpush1.msra.mxu0 0.0
      %1276 = vmatprep.subr.mxu0 0.0
      %1277 = vmatpush1.msra.mxu0 0.0
      %1278 = vmatprep.subr.mxu0 0.0
      %1279 = vmatpush1.msra.mxu0 0.0
      %1280 = vmatprep.subr.mxu0 0.0
      %1281 = vmatpush1.msra.mxu0 0.0
      %1282 = vmatprep.subr.mxu0 0.0
      %1283 = vmatpush1.msra.mxu0 0.0
      %1284 = vmatprep.subr.mxu0 0.0
      %1285 = vmatpush1.msra.mxu0 0.0
      %1286 = vmatprep.subr.mxu0 0.0
      %1287 = vmatpush1.msra.mxu0 0.0
      %1288 = vmatprep.subr.mxu0 0.0
      %1289 = vmatpush1.msra.mxu0 0.0
      %1290 = vmatprep.subr.mxu0 0.0
      %1291 = vmatpush1.msra.mxu0 0.0
      %1292 = vmatprep.subr.mxu0 0.0
      %1293 = vmatpush1.msra.mxu0 0.0
      %1294 = vmatprep.subr.mxu0 0.0
      %1295 = vmatpush1.msra.mxu0 0.0
      %1296 = vmatprep.subr.mxu0 0.0
      %1297 = vmatpush1.msra.mxu0 %v1193
      %1298 = vmatprep.subr.mxu0 0.0
      %1299 = vmatpush2.msra.mxu0 0.0
      %1300 = vmatprep.subr.mxu0 0.0
      %1301 = vmatpush2.msra.mxu0 0.0
      %1302 = vmatprep.subr.mxu0 0.0
      %1303 = vmatpush2.msra.mxu0 0.0
      %1304 = vmatprep.subr.mxu0 0.0
      %1305 = vmatpush2.msra.mxu0 0.0
      %1306 = vmatprep.subr.mxu0 0.0
      %1307 = vmatpush2.msra.mxu0 0.0
      %1308 = vmatprep.subr.mxu0 0.0
      %1309 = vmatpush2.msra.mxu0 0.0
      %1310 = vmatprep.subr.mxu0 0.0
      %1311 = vmatpush2.msra.mxu0 0.0
      %1312 = vmatprep.subr.mxu0 0.0
      %1313 = vmatpush2.msra.mxu0 0.0
      %1314 = vmatprep.subr.mxu0 0.0
      %1315 = vmatpush2.msra.mxu0 0.0
      %1316 = vmatprep.subr.mxu0 0.0
      %1317 = vmatpush2.msra.mxu0 0.0
      %1318 = vmatprep.subr.mxu0 0.0
      %1319 = vmatpush2.msra.mxu0 0.0
      %1320 = vmatprep.subr.mxu0 0.0
      %1321 = vmatpush2.msra.mxu0 0.0
      %1322 = vmatprep.subr.mxu0 0.0
      %1323 = vmatpush2.msra.mxu0 0.0
      %1324 = vmatprep.subr.mxu0 0.0
      %1325 = vmatpush2.msra.mxu0 0.0
      %1326 = vmatprep.subr.mxu0 0.0
      %1327 = vmatpush2.msra.mxu0 0.0
      %1328 = vmatprep.subr.mxu0 0.0
      %1329 = vmatpush2.msra.mxu0 0.0
      %1330 = vmatprep.mubr.f32.mxu0 0.0
      %1331 = vmatmul.mubr.f32.gmra.mxu0 %v1187
      %v1332 = vpop.f32.mrf.mxu0
      %v1333 = vadd.f32 0.0, %v1332
      %v1334 = vpop.f32.mrf.mxu0
      %1335 = vdwg.mxu0
      %v1336 = vadd.f32 %v1163, %v1262
      %v1337 = vadd.f32 %v1164, %v1264
      %v1338 = vadd.f32 %v1165, %v1333
      %s1339 = scalar_lea.vmem %s1, 28
      %v1340 = vld [vmem:[%s1339] sm:$0xf]
      %v1341 = vld [vmem:[%s165] sm:$0xff]
      %v1342 = vld [vmem:[%s165 + $0x8] sm:$0xff]
      %v1345 = vcombine.high %v1341, %v1341
      %v1346 = vcombine.high %v1342, %v1342
      %1347 = vrot.lane.b32.xlu0 %v1341, 87
      %v1348 = vpop.permute.xlu0 %1347
      %1349 = vrot.lane.b32.xlu0 %v1345, 87
      %v1350 = vpop.permute.xlu0 %1349
      %1351 = vrot.lane.b32.xlu0 %v1342, 87
      %v1352 = vpop.permute.xlu0 %1351
      %1353 = vrot.lane.b32.xlu0 %v1346, 87
      %v1354 = vpop.permute.xlu0 %1353
      %vm1355 = vcmask 711680
      %v1356 = vsel %vm1355, %v1348, %v1350
      %v1357 = vsel %vm1355, %v1350, %v1352
      %v1358 = vsel %vm1355, %v1352, %v1354
      %v1360 = vsel %vm188, %v1340, 0
      %v1362 = vsel %vm192, %v1356, 0
      %v1364 = vsel %vm192, %v1357, 0
      %v1366 = vsel %vm192, %v1358, 0
      %1368 = vmatprep.subr.mxu0 0.0
      %1369 = vmatpush1.msra.mxu0 0.0
      %1370 = vmatprep.subr.mxu0 0.0
      %1371 = vmatpush1.msra.mxu0 0.0
      %1372 = vmatprep.subr.mxu0 0.0
      %1373 = vmatpush1.msra.mxu0 0.0
      %1374 = vmatprep.subr.mxu0 0.0
      %1375 = vmatpush1.msra.mxu0 0.0
      %1376 = vmatprep.subr.mxu0 0.0
      %1377 = vmatpush1.msra.mxu0 0.0
      %1378 = vmatprep.subr.mxu0 0.0
      %1379 = vmatpush1.msra.mxu0 0.0
      %1380 = vmatprep.subr.mxu0 0.0
      %1381 = vmatpush1.msra.mxu0 0.0
      %1382 = vmatprep.subr.mxu0 0.0
      %1383 = vmatpush1.msra.mxu0 0.0
      %1384 = vmatprep.subr.mxu0 0.0
      %1385 = vmatpush1.msra.mxu0 0.0
      %1386 = vmatprep.subr.mxu0 0.0
      %1387 = vmatpush1.msra.mxu0 0.0
      %1388 = vmatprep.subr.mxu0 0.0
      %1389 = vmatpush1.msra.mxu0 0.0
      %1390 = vmatprep.subr.mxu0 0.0
      %1391 = vmatpush1.msra.mxu0 0.0
      %1392 = vmatprep.subr.mxu0 0.0
      %1393 = vmatpush1.msra.mxu0 0.0
      %1394 = vmatprep.subr.mxu0 0.0
      %1395 = vmatpush1.msra.mxu0 0.0
      %1396 = vmatprep.subr.mxu0 0.0
      %1397 = vmatpush1.msra.mxu0 0.0
      %1398 = vmatprep.subr.mxu0 %v1364
      %1399 = vmatpush1.msra.mxu0 %v1362
      %1400 = vmatprep.subr.mxu0 0.0
      %1401 = vmatpush2.msra.mxu0 0.0
      %1402 = vmatprep.subr.mxu0 0.0
      %1403 = vmatpush2.msra.mxu0 0.0
      %1404 = vmatprep.subr.mxu0 0.0
      %1405 = vmatpush2.msra.mxu0 0.0
      %1406 = vmatprep.subr.mxu0 0.0
      %1407 = vmatpush2.msra.mxu0 0.0
      %1408 = vmatprep.subr.mxu0 0.0
      %1409 = vmatpush2.msra.mxu0 0.0
      %1410 = vmatprep.subr.mxu0 0.0
      %1411 = vmatpush2.msra.mxu0 0.0
      %1412 = vmatprep.subr.mxu0 0.0
      %1413 = vmatpush2.msra.mxu0 0.0
      %1414 = vmatprep.subr.mxu0 0.0
      %1415 = vmatpush2.msra.mxu0 0.0
      %1416 = vmatprep.subr.mxu0 0.0
      %1417 = vmatpush2.msra.mxu0 0.0
      %1418 = vmatprep.subr.mxu0 0.0
      %1419 = vmatpush2.msra.mxu0 0.0
      %1420 = vmatprep.subr.mxu0 0.0
      %1421 = vmatpush2.msra.mxu0 0.0
      %1422 = vmatprep.subr.mxu0 0.0
      %1423 = vmatpush2.msra.mxu0 0.0
      %1424 = vmatprep.subr.mxu0 0.0
      %1425 = vmatpush2.msra.mxu0 0.0
      %1426 = vmatprep.subr.mxu0 0.0
      %1427 = vmatpush2.msra.mxu0 0.0
      %1428 = vmatprep.subr.mxu0 0.0
      %1429 = vmatpush2.msra.mxu0 0.0
      %1430 = vmatprep.subr.mxu0 0.0
      %1431 = vmatpush2.msra.mxu0 0.0
      %1432 = vmatprep.mubr.f32.mxu0 0.0
      %1433 = vmatmul.mubr.f32.gmra.mxu0 %v1360
      %v1434 = vpop.f32.mrf.mxu0
      %v1435 = vadd.f32 0.0, %v1434
      %v1436 = vpop.f32.mrf.mxu0
      %v1437 = vadd.f32 0.0, %v1436
      %1438 = vdwg.mxu0
      %1439 = vmatprep.subr.mxu0 0.0
      %1440 = vmatpush1.msra.mxu0 0.0
      %1441 = vmatprep.subr.mxu0 0.0
      %1442 = vmatpush1.msra.mxu0 0.0
      %1443 = vmatprep.subr.mxu0 0.0
      %1444 = vmatpush1.msra.mxu0 0.0
      %1445 = vmatprep.subr.mxu0 0.0
      %1446 = vmatpush1.msra.mxu0 0.0
      %1447 = vmatprep.subr.mxu0 0.0
      %1448 = vmatpush1.msra.mxu0 0.0
      %1449 = vmatprep.subr.mxu0 0.0
      %1450 = vmatpush1.msra.mxu0 0.0
      %1451 = vmatprep.subr.mxu0 0.0
      %1452 = vmatpush1.msra.mxu0 0.0
      %1453 = vmatprep.subr.mxu0 0.0
      %1454 = vmatpush1.msra.mxu0 0.0
      %1455 = vmatprep.subr.mxu0 0.0
      %1456 = vmatpush1.msra.mxu0 0.0
      %1457 = vmatprep.subr.mxu0 0.0
      %1458 = vmatpush1.msra.mxu0 0.0
      %1459 = vmatprep.subr.mxu0 0.0
      %1460 = vmatpush1.msra.mxu0 0.0
      %1461 = vmatprep.subr.mxu0 0.0
      %1462 = vmatpush1.msra.mxu0 0.0
      %1463 = vmatprep.subr.mxu0 0.0
      %1464 = vmatpush1.msra.mxu0 0.0
      %1465 = vmatprep.subr.mxu0 0.0
      %1466 = vmatpush1.msra.mxu0 0.0
      %1467 = vmatprep.subr.mxu0 0.0
      %1468 = vmatpush1.msra.mxu0 0.0
      %1469 = vmatprep.subr.mxu0 0.0
      %1470 = vmatpush1.msra.mxu0 %v1366
      %1471 = vmatprep.subr.mxu0 0.0
      %1472 = vmatpush2.msra.mxu0 0.0
      %1473 = vmatprep.subr.mxu0 0.0
      %1474 = vmatpush2.msra.mxu0 0.0
      %1475 = vmatprep.subr.mxu0 0.0
      %1476 = vmatpush2.msra.mxu0 0.0
      %1477 = vmatprep.subr.mxu0 0.0
      %1478 = vmatpush2.msra.mxu0 0.0
      %1479 = vmatprep.subr.mxu0 0.0
      %1480 = vmatpush2.msra.mxu0 0.0
      %1481 = vmatprep.subr.mxu0 0.0
      %1482 = vmatpush2.msra.mxu0 0.0
      %1483 = vmatprep.subr.mxu0 0.0
      %1484 = vmatpush2.msra.mxu0 0.0
      %1485 = vmatprep.subr.mxu0 0.0
      %1486 = vmatpush2.msra.mxu0 0.0
      %1487 = vmatprep.subr.mxu0 0.0
      %1488 = vmatpush2.msra.mxu0 0.0
      %1489 = vmatprep.subr.mxu0 0.0
      %1490 = vmatpush2.msra.mxu0 0.0
      %1491 = vmatprep.subr.mxu0 0.0
      %1492 = vmatpush2.msra.mxu0 0.0
      %1493 = vmatprep.subr.mxu0 0.0
      %1494 = vmatpush2.msra.mxu0 0.0
      %1495 = vmatprep.subr.mxu0 0.0
      %1496 = vmatpush2.msra.mxu0 0.0
      %1497 = vmatprep.subr.mxu0 0.0
      %1498 = vmatpush2.msra.mxu0 0.0
      %1499 = vmatprep.subr.mxu0 0.0
      %1500 = vmatpush2.msra.mxu0 0.0
      %1501 = vmatprep.subr.mxu0 0.0
      %1502 = vmatpush2.msra.mxu0 0.0
      %1503 = vmatprep.mubr.f32.mxu0 0.0
      %1504 = vmatmul.mubr.f32.gmra.mxu0 %v1360
      %v1505 = vpop.f32.mrf.mxu0
      %v1506 = vadd.f32 0.0, %v1505
      %v1507 = vpop.f32.mrf.mxu0
      %1508 = vdwg.mxu0
      %v1509 = vadd.f32 %v1336, %v1435
      %v1510 = vadd.f32 %v1337, %v1437
      %v1511 = vadd.f32 %v1338, %v1506
      %s1512 = scalar_lea.vmem %s1, 32
      %v1513 = vld [vmem:[%s1512] sm:$0xf]
      %v1514 = vld [vmem:[%s165] sm:$0xff]
      %v1515 = vld [vmem:[%s165 + $0x8] sm:$0xff]
      %v1518 = vcombine.high %v1514, %v1514
      %v1519 = vcombine.high %v1515, %v1515
      %1520 = vrot.lane.b32.xlu0 %v1514, 86
      %v1521 = vpop.permute.xlu0 %1520
      %1522 = vrot.lane.b32.xlu0 %v1518, 86
      %v1523 = vpop.permute.xlu0 %1522
      %1524 = vrot.lane.b32.xlu0 %v1515, 86
      %v1525 = vpop.permute.xlu0 %1524
      %1526 = vrot.lane.b32.xlu0 %v1519, 86
      %v1527 = vpop.permute.xlu0 %1526
      %vm1528 = vcmask 703488
      %v1529 = vsel %vm1528, %v1521, %v1523
      %v1530 = vsel %vm1528, %v1523, %v1525
      %v1531 = vsel %vm1528, %v1525, %v1527
      %v1533 = vsel %vm188, %v1513, 0
      %v1535 = vsel %vm192, %v1529, 0
      %v1537 = vsel %vm192, %v1530, 0
      %v1539 = vsel %vm192, %v1531, 0
      %1541 = vmatprep.subr.mxu0 0.0
      %1542 = vmatpush1.msra.mxu0 0.0
      %1543 = vmatprep.subr.mxu0 0.0
      %1544 = vmatpush1.msra.mxu0 0.0
      %1545 = vmatprep.subr.mxu0 0.0
      %1546 = vmatpush1.msra.mxu0 0.0
      %1547 = vmatprep.subr.mxu0 0.0
      %1548 = vmatpush1.msra.mxu0 0.0
      %1549 = vmatprep.subr.mxu0 0.0
      %1550 = vmatpush1.msra.mxu0 0.0
      %1551 = vmatprep.subr.mxu0 0.0
      %1552 = vmatpush1.msra.mxu0 0.0
      %1553 = vmatprep.subr.mxu0 0.0
      %1554 = vmatpush1.msra.mxu0 0.0
      %1555 = vmatprep.subr.mxu0 0.0
      %1556 = vmatpush1.msra.mxu0 0.0
      %1557 = vmatprep.subr.mxu0 0.0
      %1558 = vmatpush1.msra.mxu0 0.0
      %1559 = vmatprep.subr.mxu0 0.0
      %1560 = vmatpush1.msra.mxu0 0.0
      %1561 = vmatprep.subr.mxu0 0.0
      %1562 = vmatpush1.msra.mxu0 0.0
      %1563 = vmatprep.subr.mxu0 0.0
      %1564 = vmatpush1.msra.mxu0 0.0
      %1565 = vmatprep.subr.mxu0 0.0
      %1566 = vmatpush1.msra.mxu0 0.0
      %1567 = vmatprep.subr.mxu0 0.0
      %1568 = vmatpush1.msra.mxu0 0.0
      %1569 = vmatprep.subr.mxu0 0.0
      %1570 = vmatpush1.msra.mxu0 0.0
      %1571 = vmatprep.subr.mxu0 %v1537
      %1572 = vmatpush1.msra.mxu0 %v1535
      %1573 = vmatprep.subr.mxu0 0.0
      %1574 = vmatpush2.msra.mxu0 0.0
      %1575 = vmatprep.subr.mxu0 0.0
      %1576 = vmatpush2.msra.mxu0 0.0
      %1577 = vmatprep.subr.mxu0 0.0
      %1578 = vmatpush2.msra.mxu0 0.0
      %1579 = vmatprep.subr.mxu0 0.0
      %1580 = vmatpush2.msra.mxu0 0.0
      %1581 = vmatprep.subr.mxu0 0.0
      %1582 = vmatpush2.msra.mxu0 0.0
      %1583 = vmatprep.subr.mxu0 0.0
      %1584 = vmatpush2.msra.mxu0 0.0
      %1585 = vmatprep.subr.mxu0 0.0
      %1586 = vmatpush2.msra.mxu0 0.0
      %1587 = vmatprep.subr.mxu0 0.0
      %1588 = vmatpush2.msra.mxu0 0.0
      %1589 = vmatprep.subr.mxu0 0.0
      %1590 = vmatpush2.msra.mxu0 0.0
      %1591 = vmatprep.subr.mxu0 0.0
      %1592 = vmatpush2.msra.mxu0 0.0
      %1593 = vmatprep.subr.mxu0 0.0
      %1594 = vmatpush2.msra.mxu0 0.0
      %1595 = vmatprep.subr.mxu0 0.0
      %1596 = vmatpush2.msra.mxu0 0.0
      %1597 = vmatprep.subr.mxu0 0.0
      %1598 = vmatpush2.msra.mxu0 0.0
      %1599 = vmatprep.subr.mxu0 0.0
      %1600 = vmatpush2.msra.mxu0 0.0
      %1601 = vmatprep.subr.mxu0 0.0
      %1602 = vmatpush2.msra.mxu0 0.0
      %1603 = vmatprep.subr.mxu0 0.0
      %1604 = vmatpush2.msra.mxu0 0.0
      %1605 = vmatprep.mubr.f32.mxu0 0.0
      %1606 = vmatmul.mubr.f32.gmra.mxu0 %v1533
      %v1607 = vpop.f32.mrf.mxu0
      %v1608 = vadd.f32 0.0, %v1607
      %v1609 = vpop.f32.mrf.mxu0
      %v1610 = vadd.f32 0.0, %v1609
      %1611 = vdwg.mxu0
      %1612 = vmatprep.subr.mxu0 0.0
      %1613 = vmatpush1.msra.mxu0 0.0
      %1614 = vmatprep.subr.mxu0 0.0
      %1615 = vmatpush1.msra.mxu0 0.0
      %1616 = vmatprep.subr.mxu0 0.0
      %1617 = vmatpush1.msra.mxu0 0.0
      %1618 = vmatprep.subr.mxu0 0.0
      %1619 = vmatpush1.msra.mxu0 0.0
      %1620 = vmatprep.subr.mxu0 0.0
      %1621 = vmatpush1.msra.mxu0 0.0
      %1622 = vmatprep.subr.mxu0 0.0
      %1623 = vmatpush1.msra.mxu0 0.0
      %1624 = vmatprep.subr.mxu0 0.0
      %1625 = vmatpush1.msra.mxu0 0.0
      %1626 = vmatprep.subr.mxu0 0.0
      %1627 = vmatpush1.msra.mxu0 0.0
      %1628 = vmatprep.subr.mxu0 0.0
      %1629 = vmatpush1.msra.mxu0 0.0
      %1630 = vmatprep.subr.mxu0 0.0
      %1631 = vmatpush1.msra.mxu0 0.0
      %1632 = vmatprep.subr.mxu0 0.0
      %1633 = vmatpush1.msra.mxu0 0.0
      %1634 = vmatprep.subr.mxu0 0.0
      %1635 = vmatpush1.msra.mxu0 0.0
      %1636 = vmatprep.subr.mxu0 0.0
      %1637 = vmatpush1.msra.mxu0 0.0
      %1638 = vmatprep.subr.mxu0 0.0
      %1639 = vmatpush1.msra.mxu0 0.0
      %1640 = vmatprep.subr.mxu0 0.0
      %1641 = vmatpush1.msra.mxu0 0.0
      %1642 = vmatprep.subr.mxu0 0.0
      %1643 = vmatpush1.msra.mxu0 %v1539
      %1644 = vmatprep.subr.mxu0 0.0
      %1645 = vmatpush2.msra.mxu0 0.0
      %1646 = vmatprep.subr.mxu0 0.0
      %1647 = vmatpush2.msra.mxu0 0.0
      %1648 = vmatprep.subr.mxu0 0.0
      %1649 = vmatpush2.msra.mxu0 0.0
      %1650 = vmatprep.subr.mxu0 0.0
      %1651 = vmatpush2.msra.mxu0 0.0
      %1652 = vmatprep.subr.mxu0 0.0
      %1653 = vmatpush2.msra.mxu0 0.0
      %1654 = vmatprep.subr.mxu0 0.0
      %1655 = vmatpush2.msra.mxu0 0.0
      %1656 = vmatprep.subr.mxu0 0.0
      %1657 = vmatpush2.msra.mxu0 0.0
      %1658 = vmatprep.subr.mxu0 0.0
      %1659 = vmatpush2.msra.mxu0 0.0
      %1660 = vmatprep.subr.mxu0 0.0
      %1661 = vmatpush2.msra.mxu0 0.0
      %1662 = vmatprep.subr.mxu0 0.0
      %1663 = vmatpush2.msra.mxu0 0.0
      %1664 = vmatprep.subr.mxu0 0.0
      %1665 = vmatpush2.msra.mxu0 0.0
      %1666 = vmatprep.subr.mxu0 0.0
      %1667 = vmatpush2.msra.mxu0 0.0
      %1668 = vmatprep.subr.mxu0 0.0
      %1669 = vmatpush2.msra.mxu0 0.0
      %1670 = vmatprep.subr.mxu0 0.0
      %1671 = vmatpush2.msra.mxu0 0.0
      %1672 = vmatprep.subr.mxu0 0.0
      %1673 = vmatpush2.msra.mxu0 0.0
      %1674 = vmatprep.subr.mxu0 0.0
      %1675 = vmatpush2.msra.mxu0 0.0
      %1676 = vmatprep.mubr.f32.mxu0 0.0
      %1677 = vmatmul.mubr.f32.gmra.mxu0 %v1533
      %v1678 = vpop.f32.mrf.mxu0
      %v1679 = vadd.f32 0.0, %v1678
      %v1680 = vpop.f32.mrf.mxu0
      %1681 = vdwg.mxu0
      %v1682 = vadd.f32 %v1509, %v1608
      %v1683 = vadd.f32 %v1510, %v1610
      %v1684 = vadd.f32 %v1511, %v1679
      %v1685 = vld [vmem:[%s2] sm:$0x7]
      %v1687 = vlaneseq
      %v1688 = vshrl.u32 %v1687, 7
      %v1689 = vsub.s32 0, %v1688
      %v1690 = vrot.slane %v1685, %v1689
      %v1691 = vlaneseq
      %v1692 = vshrl.u32 %v1691, 7
      %v1693 = vsub.s32 1, %v1692
      %v1694 = vrot.slane %v1685, %v1693
      %v1695 = vlaneseq
      %v1696 = vshrl.u32 %v1695, 7
      %v1697 = vsub.s32 2, %v1696
      %v1698 = vrot.slane %v1685, %v1697
      %v1702 = vmul.f32 %v1682, %v1690
      %v1703 = vmul.f32 %v1683, %v1694
      %v1704 = vmul.f32 %v1684, %v1698
      %v1705 = vsel %vm192, %v1702, 0.0
      %v1706 = vsel %vm192, %v1703, 0.0
      %v1707 = vadd.f32 %v1705, %v1706
      %vm1708 = vcmask 846848
      %v1709 = vsel %vm1708, %v1704, 0.0
      %v1710 = vadd.f32 %v1707, %v1709
      %1711 = vadd.xlane.f32.xlu0 %v1710
      %v1712 = vpop.xlane.xlu0 %1711
      %v1713 = vmul.f32 %v1712, 0.0030864198
      %v1714 = vsub.f32 %v1682, %v1713
      %v1715 = vsub.f32 %v1683, %v1713
      %v1716 = vsub.f32 %v1684, %v1713
      %v1717 = vmul.f32 %v1714, %v1714
      %v1718 = vmul.f32 %v1715, %v1715
      %v1719 = vmul.f32 %v1716, %v1716
      %v1720 = vmul.f32 %v1717, %v1690
      %v1721 = vmul.f32 %v1718, %v1694
      %v1722 = vmul.f32 %v1719, %v1698
      %v1723 = vsel %vm192, %v1720, 0.0
      %v1724 = vsel %vm192, %v1721, 0.0
      %v1725 = vadd.f32 %v1723, %v1724
      %v1726 = vsel %vm1708, %v1722, 0.0
      %v1727 = vadd.f32 %v1725, %v1726
      %1728 = vadd.xlane.f32.xlu0 %v1727
      %v1729 = vpop.xlane.xlu0 %1728
      %v1730 = vmul.f32 %v1729, 0.0030864198
      %v1731 = vadd.f32 %v1730, 1e-05
      %v1732 = vrsqrt.pop %v1731
      %v1733 = vmul.f32 %v1714, %v1732
      %v1734 = vmul.f32 %v1715, %v1732
      %v1735 = vmul.f32 %v1716, %v1732
      %vm1736 = vcmp.gt.f32.partialorder %v1733, 0.0
      %vm1737 = vcmp.gt.f32.partialorder %v1734, 0.0
      %vm1738 = vcmp.gt.f32.partialorder %v1735, 0.0
      %v1739 = vmul.f32 %v1733, 0.2
      %v1740 = vmul.f32 %v1734, 0.2
      %v1741 = vmul.f32 %v1735, 0.2
      %v1742 = vsel %vm1736, %v1733, %v1739
      %v1743 = vsel %vm1737, %v1734, %v1740
      %v1744 = vsel %vm1738, %v1735, %v1741
      %v1747 = vcombine.low %v1742, %v1743
      %1749 = vst [vmem:[%s170] sm:$0xff] %v1747
      %1750 = vst.msk [vmem:[%s170 + $0x8] sm:$0xf] %vm1708, %v1744
      %p1751 = scmp.lt.s32.totalorder %s14, 1
      %s1752 = scalar_select %p1751, %s14, 1
      %s1753 = smul.addr %s1752, 3
      %s1754 = smul.addr %s1753, 4
      %s1755 = scalar_lea.vmem %s3, %s1754
      // Predicated region
      $region33: #{conv_transpose_block.1} parent=31 // pred_check
        %p1756 = pneg %p100
      $region34: #{conv_transpose_block.1} parent=31 // pred_check_branch
        %1758 = sbr.rel (%p1756) target = $region36
      $region35: #{conv_transpose_block.1} parent=31 // pred_region
        _
      $region36: #{conv_transpose_block.1} parent=31 // pred_fallthru
        _
    $region32: #{conv_transpose_block.1} parent=5 // pred_fallthru
      _
    %p1759 = scmp.le.s32.totalorder 2, %s9
    // Predicated region
    $region37: #{conv_transpose_block.1} parent=5 // pred_check
      %p1760 = pneg %p1759
    $region38: #{conv_transpose_block.1} parent=5 // pred_check_branch
      %1762 = sbr.rel (%p1760) target = $region40
    $region39: #{conv_transpose_block.1} parent=5 // pred_region
      %s1763 = ssub.s32 %s9, 2
      // Predicated region
      $region41: #{conv_transpose_block.1} parent=39 // pred_check
        %p1764 = pneg %p106
      $region42: #{conv_transpose_block.1} parent=39 // pred_check_branch
        %1766 = sbr.rel (%p1764) target = $region44
      $region43: #{conv_transpose_block.1} parent=39 // pred_region
        %p1767 = scmp.lt.s32.totalorder %s15, 1
        %s1768 = scalar_select %p1767, %s15, 1
        %s1769 = smul.addr %s1768, 3
        %s1770 = smul.addr %s1769, 4
        %s1771 = scalar_lea.vmem %s3, %s1770
      $region44: #{conv_transpose_block.1} parent=39 // pred_fallthru
        _
    $region40: #{conv_transpose_block.1} parent=5 // pred_fallthru
      _
  $region6: #{conv_transpose_block.1} parent=0 // loop_footer
    %s13 = sadd.s32 1, %s9
  $region7: #{conv_transpose_block.1} parent=0 // loop_footer_branch
    %8 = sbr.rel target = $region3
  $region8: #{conv_transpose_block.1} parent=0 // loop_exit
    _

</llo_original>
